<compile_context>
chip_gen: v7x
topology: tpu7x:2x2x1
jax: 0.10.0
libtpu: 0.0.40
codegen_flags: <defaults>
</compile_context>

<pallas_src>
import math

import jax
import jax.numpy as jnp
from jax import lax
from jax.experimental import pallas as pl
from jax.experimental.pallas import tpu as pltpu

# ---- config (mirrors ConfigMamba) -------------------------------------------
DIM = 64
D_STATE = 16
EXPAND = 2
D_INNER = EXPAND * DIM               # 128
DT_RANK = math.ceil(DIM / 16)        # 4
D_CONV = 4
EPS = 1e-5
CHUNK = 8                            # f32 sublanes per vreg; scan chunk size


# ---- kernel ------------------------------------------------------------------
def block_kernel(x_ref, w_rms_ref, w_in_ref, w_conv_ref, b_conv_ref,
                 w_dbc_ref, b_dt_ref, a_ref, d_vec_ref, w_out_ref,
                 o_ref, res_sc, delta_sc, du_sc, bc_sc, y_sc, da_sc, dbu_sc):
    BB, L, _ = x_ref.shape
    BBL = BB * L
    n_chunks = L // CHUNK

    x = x_ref[...].reshape(BBL, DIM)                       # (BB*L, DIM) f32

    # RMSNorm: x * rsqrt(mean(x^2, -1) + eps) * weight
    ms = jnp.mean(x * x, axis=-1, keepdims=True)
    xn = x * lax.rsqrt(ms + EPS) * w_rms_ref[...]

    # fused in_proj: one (BBL,64)@(64,256) MXU pass; x-path / res-path are slices.
    # res is parked in VMEM scratch so nothing big stays live across the scan.
    xr = jnp.dot(xn, w_in_ref[...], preferred_element_type=jnp.float32)
    xp = xr[:, :D_INNER]                                   # (BBL, D_INNER)
    res_sc[...] = xr[:, D_INNER:]                          # gate path, used at the end

    # causal depthwise conv1d (kernel 4, left pad 3) via XLU sublane rolls.
    # `local` is the token index within each batch row, so rolls never leak across
    # the BB independent rows packed into this grid step.
    local = lax.broadcasted_iota(jnp.int32, (L, 1), 0)
    if BB > 1:
        local = jnp.tile(local, (BB, 1))
    conv = xp * w_conv_ref[D_CONV - 1:D_CONV, :] + b_conv_ref[...]   # tap j=0 + bias
    for j in range(1, D_CONV):
        tap = w_conv_ref[D_CONV - 1 - j:D_CONV - j, :]               # (1, D_INNER)
        shifted = jnp.where(local >= j, pltpu.roll(xp, shift=j, axis=0), 0.0)
        conv = conv + shifted * tap
    u = conv * jax.nn.sigmoid(conv)                        # SiLU, (BBL, D_INNER)

    # fused x_proj (+ folded dt_proj): one (BBL,128)@(128,160) matmul -> [delta | B,C]
    dbc = jnp.dot(u, w_dbc_ref[...], preferred_element_type=jnp.float32)
    delta = jax.nn.softplus(dbc[:, :D_INNER] + b_dt_ref[...])        # (BBL, D_INNER)
    delta_sc[...] = delta
    du_sc[...] = delta * u
    bc_sc[...] = dbc[:, D_INNER:]                                    # (BBL, 2*N)

    # skip term staged into the y accumulator; the scan adds onto it per chunk.
    y_sc[...] = u * d_vec_ref[...]

    A = a_ref[...]                                         # (N, D_INNER) = -exp(A_log)^T

    # selective scan: h_t = exp(delta_t*A) * h_{t-1} + delta_t*B_t*u_t ; y_t = C_t . h_t
    # Chunked fori_loop over time; BB independent chains carried jointly so the VALU
    # slots are filled during the otherwise latency-bound recurrence.
    def chunk_body(c, h_all):
        new_h = []
        for b in range(BB):
            start = pl.multiple_of(b * L + c * CHUNK, CHUNK)
            dlt_c = delta_sc[pl.ds(start, CHUNK), :]       # (CHUNK, D_INNER)
            du_c = du_sc[pl.ds(start, CHUNK), :]           # (CHUNK, D_INNER)
            bc_c = bc_sc[pl.ds(start, CHUNK), :]           # (CHUNK, 2*N)
            bT = bc_c[:, :D_STATE].T                       # (N, CHUNK)
            cT = bc_c[:, D_STATE:].T                       # (N, CHUNK)

            # stage the chunk's dA / dB*u into VMEM slabs: exp runs on the EUP off
            # the serial chain; the recurrence streams 2-vreg rows back with vld
            # (slack slots), keeping register pressure flat regardless of BB.
            # TODO(synk): stride-0 sublane-broadcast loads (pl.ds(row, N, stride=0))
            # would also remove the per-token sublane splat below.
            for j in range(CHUNK):
                dst = (b * CHUNK + j) * D_STATE            # static offset
                da_sc[dst:dst + D_STATE, :] = jnp.exp(dlt_c[j:j + 1, :] * A)
                dbu_sc[dst:dst + D_STATE, :] = du_c[j:j + 1, :] * bT[:, j:j + 1]

            # serial chain for this batch row: one FMA + one cross-sublane reduce/token
            hb = h_all[b * D_STATE:(b + 1) * D_STATE, :]
            y_rows = []
            for j in range(CHUNK):
                dst = (b * CHUNK + j) * D_STATE
                hb = da_sc[dst:dst + D_STATE, :] * hb + dbu_sc[dst:dst + D_STATE, :]
                y_rows.append(jnp.sum(hb * cT[:, j:j + 1], axis=0, keepdims=True))
            y_sc[pl.ds(start, CHUNK), :] = (
                y_sc[pl.ds(start, CHUNK), :] + jnp.concatenate(y_rows, axis=0))
            new_h.append(hb)
        return new_h[0] if BB == 1 else jnp.concatenate(new_h, axis=0)

    lax.fori_loop(0, n_chunks, chunk_body,
                  jnp.zeros((BB * D_STATE, D_INNER), jnp.float32))

    # SiLU gate, out_proj, residual
    res = res_sc[...]
    y = y_sc[...] * (res * jax.nn.sigmoid(res))
    # TODO(synk): bf16 matmul inputs (f32 accumulate) would ~3x the MXU portion but
    # need the tolerance re-validated; kept f32 to preserve the checked accuracy.
    out = jnp.dot(y, w_out_ref[...], preferred_element_type=jnp.float32)  # (BBL, DIM)
    o_ref[...] = x_ref[...] + out.reshape(BB, L, DIM)


# ---- wrapper -----------------------------------------------------------------
KERNEL_ARGS = ("w_rms", "w_in", "w_conv", "b_conv", "w_dbc", "b_dt",
               "a_neg", "d_vec", "w_out")


def _choose_bb(B, L):
    """Batch rows grouped per grid step: amortize ~0.35us/step overhead and enlarge
    the matmul M, but keep >=2 grid steps (v7x has 2 TensorCores sharding the
    'parallel' axis) and keep per-step scratch well inside v7x's 64 MiB VMEM."""
    bb = 1
    for cand in range(1, B + 1):
        if B % cand:
            continue
        if B >= 2 and B // cand < 2:
            continue                      # keep both v7x TensorCores busy
        if cand * L > 1024 or cand > 8:
            continue                      # VMEM / scratch-slab budget
        bb = cand
    return bb


def block_forward(x, params):
    B, L, d = x.shape
    assert d == DIM and L % CHUNK == 0

    BB = _choose_bb(B, L)
    BBL = BB * L

    w_xp = params["w_xp"]
    # dt_proj folded into x_proj, then fused with the B/C projection: a single
    # (D_INNER, D_INNER + 2*D_STATE) weight -> one u-matmul in the kernel.
    w_delta = jnp.dot(w_xp[:, :DT_RANK], params["w_dt"],
                      preferred_element_type=jnp.float32)
    kargs = {
        "w_rms": params["w_rms"],
        "w_in": params["w_in"],                                      # (DIM, 2*D_INNER)
        "w_conv": params["w_conv"],
        "b_conv": params["b_conv"],
        "w_dbc": jnp.concatenate([w_delta, w_xp[:, DT_RANK:]], axis=1),
        "b_dt": params["b_dt"],
        "a_neg": -jnp.exp(params["a_log_t"]),
        "d_vec": params["d_vec"],
        "w_out": params["w_out"],
    }
    arrays = [kargs[name] for name in KERNEL_ARGS]

    in_specs = [pl.BlockSpec((BB, L, DIM), lambda g: (g, 0, 0))]
    for a in arrays:                                       # all params are 2D, untiled
        in_specs.append(pl.BlockSpec(a.shape, lambda g: (0, 0)))
    out_specs = pl.BlockSpec((BB, L, DIM), lambda g: (g, 0, 0))

    flops = 2 * B * L * (DIM * 2 * D_INNER
                         + D_INNER * (D_INNER + 2 * D_STATE)
                         + D_INNER * DIM
                         + D_CONV * D_INNER
                         + 3 * D_STATE * D_INNER)
    transcendentals = B * L * (D_STATE * D_INNER + 4 * D_INNER)
    # parameters are fetched once (constant index maps), not once per grid step
    bytes_accessed = 4 * (2 * x.size + sum(int(a.size) for a in arrays))

    return pl.pallas_call(
        block_kernel,
        out_shape=jax.ShapeDtypeStruct((B, L, DIM), jnp.float32),
        grid_spec=pltpu.PrefetchScalarGridSpec(
            num_scalar_prefetch=0,
            grid=(B // BB,),
            in_specs=in_specs,
            out_specs=out_specs,
            scratch_shapes=[
                pltpu.VMEM((BBL, D_INNER), jnp.float32),              # res (gate path)
                pltpu.VMEM((BBL, D_INNER), jnp.float32),              # delta
                pltpu.VMEM((BBL, D_INNER), jnp.float32),              # delta * u
                pltpu.VMEM((BBL, 2 * D_STATE), jnp.float32),          # [B, C]
                pltpu.VMEM((BBL, D_INNER), jnp.float32),              # y accumulator
                pltpu.VMEM((BB * CHUNK * D_STATE, D_INNER), jnp.float32),  # dA slab
                pltpu.VMEM((BB * CHUNK * D_STATE, D_INNER), jnp.float32),  # dB*u slab
            ],
        ),
        compiler_params=pltpu.CompilerParams(
            dimension_semantics=("parallel",),
            vmem_limit_bytes=32 * 1024 * 1024,
        ),
        cost_estimate=pl.CostEstimate(
            flops=flops, transcendentals=transcendentals,
            bytes_accessed=bytes_accessed),
    )(x, *arrays)


# ---- deterministic parameter init (shapes from MambaBlock.__init__) ----------
def init_params(key):
    ks = jax.random.split(key, 8)

    def lin(k, fan_in, shape):
        bound = 1.0 / math.sqrt(fan_in)
        return jax.random.uniform(k, shape, jnp.float32, -bound, bound)

    params = {
        "w_rms": jnp.ones((1, DIM), jnp.float32),                       # RMSNorm weight
        "w_in": lin(ks[0], DIM, (DIM, 2 * D_INNER)),                    # in_proj (transposed)
        "w_conv": lin(ks[1], D_CONV, (D_CONV, D_INNER)),                # depthwise taps (k, c)
        "b_conv": lin(ks[2], D_CONV, (1, D_INNER)),                     # conv bias
        "w_xp": lin(ks[3], D_INNER, (D_INNER, DT_RANK + 2 * D_STATE)),  # x_proj (transposed)
        "w_dt": lin(ks[4], DT_RANK, (DT_RANK, D_INNER)),                # dt_proj (transposed)
        "b_dt": lin(ks[5], DT_RANK, (1, D_INNER)),                      # dt_proj bias
        # A_log = log(arange(1..N)) broadcast to (d_inner, N); stored as (N, d_inner)
        "a_log_t": jnp.broadcast_to(
            jnp.log(jnp.arange(1, D_STATE + 1, dtype=jnp.float32))[:, None],
            (D_STATE, D_INNER)),
        "d_vec": jnp.ones((1, D_INNER), jnp.float32),                   # D
        "w_out": lin(ks[6], D_INNER, (D_INNER, DIM)),                   # out_proj (transposed)
    }
    return params


# ---- pure-JAX reference (original, unfused parameterization) -----------------
def reference(x, p):
    ms = jnp.mean(x * x, axis=-1, keepdims=True)
    xn = x * jax.lax.rsqrt(ms + EPS) * p["w_rms"][0]
    xr = xn @ p["w_in"]
    xp, res = xr[..., :D_INNER], xr[..., D_INNER:]
    L = x.shape[1]
    pad = jnp.pad(xp, ((0, 0), (D_CONV - 1, 0), (0, 0)))
    conv = sum(pad[:, k:k + L, :] * p["w_conv"][k] for k in range(D_CONV)) + p["b_conv"][0]
    u = jax.nn.silu(conv)
    x_dbl = u @ p["w_xp"]
    delta = jax.nn.softplus(x_dbl[..., :DT_RANK] @ p["w_dt"] + p["b_dt"][0])
    Bm = x_dbl[..., DT_RANK:DT_RANK + D_STATE]
    Cm = x_dbl[..., DT_RANK + D_STATE:]
    A = -jnp.exp(p["a_log_t"])                           # (N, D_INNER)

    def step(h, inp):
        d_t, u_t, b_row, c_row = inp
        dA = jnp.exp(d_t[None, :] * A)
        dBu = (d_t * u_t)[None, :] * b_row[:, None]
        h = dA * h + dBu
        return h, jnp.sum(h * c_row[:, None], axis=0)

    def per_batch(d_b, u_b, B_b, C_b):
        _, ys = jax.lax.scan(step, jnp.zeros((D_STATE, D_INNER), jnp.float32),
                             (d_b, u_b, B_b, C_b))
        return ys

    y = jax.vmap(per_batch)(delta, u, Bm, Cm)
    y = y + u * p["d_vec"][0]
    y = y * jax.nn.silu(res)
    return y @ p["w_out"] + x


if __name__ == "__main__":
    key = jax.random.PRNGKey(0)
    kx, kp = jax.random.split(key)
    B, L = 2, 8
    x = jax.random.normal(kx, (B, L, DIM), dtype=jnp.float32)
    params = init_params(kp)

    out = jax.jit(lambda xx: block_forward(xx, params))(x)
    out = jax.block_until_ready(out)

    ref = reference(x, params)
    assert out.shape == (B, L, DIM)
    max_err = float(jnp.max(jnp.abs(out - ref)))
    # dt_proj folding + MXU default-precision reassociation make bit-exact f32
    # agreement impossible; keep a tight-but-honest tolerance.
    assert jnp.allclose(out, ref, atol=2e-2, rtol=2e-2), f"max abs err {max_err}"
    print("KERNEL_OK")
</pallas_src>

<mosaic_0001>
module attributes {stable_mosaic.version = 11 : i64} {
  func.func @block_kernel(%arg0: i32, %arg1: memref<1x8x64xf32, #tpu.memory_space<vmem>>, %arg2: memref<1x64xf32, #tpu.memory_space<vmem>>, %arg3: memref<64x256xf32, #tpu.memory_space<vmem>>, %arg4: memref<4x128xf32, #tpu.memory_space<vmem>>, %arg5: memref<1x128xf32, #tpu.memory_space<vmem>>, %arg6: memref<128x160xf32, #tpu.memory_space<vmem>>, %arg7: memref<1x128xf32, #tpu.memory_space<vmem>>, %arg8: memref<16x128xf32, #tpu.memory_space<vmem>>, %arg9: memref<1x128xf32, #tpu.memory_space<vmem>>, %arg10: memref<128x64xf32, #tpu.memory_space<vmem>>, %arg11: memref<1x8x64xf32, #tpu.memory_space<vmem>>, %arg12: memref<8x128xf32, #tpu.memory_space<vmem>>, %arg13: memref<8x128xf32, #tpu.memory_space<vmem>>, %arg14: memref<8x128xf32, #tpu.memory_space<vmem>>, %arg15: memref<8x32xf32, #tpu.memory_space<vmem>>, %arg16: memref<8x128xf32, #tpu.memory_space<vmem>>, %arg17: memref<128x128xf32, #tpu.memory_space<vmem>>, %arg18: memref<128x128xf32, #tpu.memory_space<vmem>>) attributes {dimension_semantics = [#tpu.dimension_semantics<parallel>], iteration_bounds = array<i64: 2>, scalar_prefetch = 0 : i64, scratch_operands = 7 : i64, tpu.core_type = #tpu.core_type<tc>, window_params = [{transform_indices = @transform_0, window_bounds = array<i64: 1, 8, 64>}, {pipeline_mode = #tpu.pipeline_mode<synchronous>, transform_indices = @transform_1, window_bounds = array<i64: 1, 64>}, {pipeline_mode = #tpu.pipeline_mode<synchronous>, transform_indices = @transform_2, window_bounds = array<i64: 64, 256>}, {pipeline_mode = #tpu.pipeline_mode<synchronous>, transform_indices = @transform_3, window_bounds = array<i64: 4, 128>}, {pipeline_mode = #tpu.pipeline_mode<synchronous>, transform_indices = @transform_4, window_bounds = array<i64: 1, 128>}, {pipeline_mode = #tpu.pipeline_mode<synchronous>, transform_indices = @transform_5, window_bounds = array<i64: 128, 160>}, {pipeline_mode = #tpu.pipeline_mode<synchronous>, transform_indices = @transform_6, window_bounds = array<i64: 1, 128>}, {pipeline_mode = #tpu.pipeline_mode<synchronous>, transform_indices = @transform_7, window_bounds = array<i64: 16, 128>}, {pipeline_mode = #tpu.pipeline_mode<synchronous>, transform_indices = @transform_8, window_bounds = array<i64: 1, 128>}, {pipeline_mode = #tpu.pipeline_mode<synchronous>, transform_indices = @transform_9, window_bounds = array<i64: 128, 64>}, {transform_indices = @transform_10, window_bounds = array<i64: 1, 8, 64>}]} {
    %c0 = arith.constant 0 : index
    %c0_0 = arith.constant 0 : index
    %c0_1 = arith.constant 0 : index
    %0 = vector.load %arg1[%c0, %c0_0, %c0_1] : memref<1x8x64xf32, #tpu.memory_space<vmem>>, vector<1x8x64xf32>
    %1 = vector.shape_cast %0 : vector<1x8x64xf32> to vector<8x64xf32>
    %2 = arith.mulf %1, %1 : vector<8x64xf32>
    %cst = arith.constant dense<0.000000e+00> : vector<8xf32>
    %3 = vector.multi_reduction <add>, %2, %cst [1] : vector<8x64xf32> to vector<8xf32>
    %4 = vector.shape_cast %3 : vector<8xf32> to vector<8x1xf32>
    %cst_2 = arith.constant 6.400000e+01 : f32
    %5 = vector.broadcast %cst_2 : f32 to vector<8x1xf32>
    %6 = arith.divf %4, %5 : vector<8x1xf32>
    %cst_3 = arith.constant 9.99999974E-6 : f32
    %7 = vector.broadcast %cst_3 : f32 to vector<8x1xf32>
    %8 = arith.addf %6, %7 : vector<8x1xf32>
    %9 = math.rsqrt %8 : vector<8x1xf32>
    %10 = vector.broadcast %9 : vector<8x1xf32> to vector<8x64xf32>
    %11 = arith.mulf %1, %10 : vector<8x64xf32>
    %c0_4 = arith.constant 0 : index
    %c0_5 = arith.constant 0 : index
    %12 = vector.load %arg2[%c0_4, %c0_5] : memref<1x64xf32, #tpu.memory_space<vmem>>, vector<1x64xf32>
    %13 = vector.broadcast %12 : vector<1x64xf32> to vector<8x64xf32>
    %14 = arith.mulf %11, %13 : vector<8x64xf32>
    %c0_6 = arith.constant 0 : index
    %c0_7 = arith.constant 0 : index
    %15 = vector.load %arg3[%c0_6, %c0_7] : memref<64x256xf32, #tpu.memory_space<vmem>>, vector<64x256xf32>
    %cst_8 = arith.constant dense<0.000000e+00> : vector<8x256xf32>
    %16 = tpu.matmul %14, %15, %cst_8 {dimension_numbers = #tpu.dot_dimension_numbers<[1], [0], [0], [1], [0, 0, 1, 1], [], []>} : vector<8x64xf32>, vector<64x256xf32>, vector<8x256xf32> -> vector<8x256xf32>
    %17 = vector.extract_strided_slice %16 {offsets = [0, 0], sizes = [8, 128], strides = [1, 1]} : vector<8x256xf32> to vector<8x128xf32>
    %18 = vector.extract_strided_slice %16 {offsets = [0, 128], sizes = [8, 128], strides = [1, 1]} : vector<8x256xf32> to vector<8x128xf32>
    %c0_9 = arith.constant 0 : index
    %c0_10 = arith.constant 0 : index
    %19 = vector.load %arg12[%c0_9, %c0_10] : memref<8x128xf32, #tpu.memory_space<vmem>>, vector<8x128xf32>
    tpu.vector_store %arg12[%c0_9, %c0_10], %18 {strides = array<i32>} : memref<8x128xf32, #tpu.memory_space<vmem>>, vector<8x128xf32>,
    %20 = tpu.iota {dimensions = array<i32: 0>} : vector<8x1xi32>
    %c3 = arith.constant 3 : index
    %c0_11 = arith.constant 0 : index
    %21 = vector.load %arg4[%c3, %c0_11] : memref<4x128xf32, #tpu.memory_space<vmem>>, vector<1x128xf32>
    %22 = vector.broadcast %21 : vector<1x128xf32> to vector<8x128xf32>
    %23 = arith.mulf %17, %22 : vector<8x128xf32>
    %c0_12 = arith.constant 0 : index
    %c0_13 = arith.constant 0 : index
    %24 = vector.load %arg5[%c0_12, %c0_13] : memref<1x128xf32, #tpu.memory_space<vmem>>, vector<1x128xf32>
    %25 = vector.broadcast %24 : vector<1x128xf32> to vector<8x128xf32>
    %26 = arith.addf %23, %25 : vector<8x128xf32>
    %c2 = arith.constant 2 : index
    %c0_14 = arith.constant 0 : index
    %27 = vector.load %arg4[%c2, %c0_14] : memref<4x128xf32, #tpu.memory_space<vmem>>, vector<1x128xf32>
    %c1_i32 = arith.constant 1 : i32
    %28 = vector.broadcast %c1_i32 : i32 to vector<8x1xi32>
    %29 = arith.cmpi sge, %20, %28 : vector<8x1xi32>
    %c1_i32_15 = arith.constant 1 : i32
    %30 = tpu.dynamic_rotate %17 by %c1_i32_15 dim 0 : vector<8x128xf32>, i32 -> vector<8x128xf32>
    %cst_16 = arith.constant 0.000000e+00 : f32
    %31 = vector.shape_cast %29 : vector<8x1xi1> to vector<8x1xi1>
    %32 = vector.broadcast %31 : vector<8x1xi1> to vector<8x128xi1>
    %33 = vector.broadcast %cst_16 : f32 to vector<8x128xf32>
    %34 = arith.select %32, %30, %33 : vector<8x128xi1>, vector<8x128xf32>
    %35 = vector.broadcast %27 : vector<1x128xf32> to vector<8x128xf32>
    %36 = arith.mulf %34, %35 : vector<8x128xf32>
    %37 = arith.addf %26, %36 : vector<8x128xf32>
    %c1 = arith.constant 1 : index
    %c0_17 = arith.constant 0 : index
    %38 = vector.load %arg4[%c1, %c0_17] : memref<4x128xf32, #tpu.memory_space<vmem>>, vector<1x128xf32>
    %c2_i32 = arith.constant 2 : i32
    %39 = vector.broadcast %c2_i32 : i32 to vector<8x1xi32>
    %40 = arith.cmpi sge, %20, %39 : vector<8x1xi32>
    %c2_i32_18 = arith.constant 2 : i32
    %41 = tpu.dynamic_rotate %17 by %c2_i32_18 dim 0 : vector<8x128xf32>, i32 -> vector<8x128xf32>
    %cst_19 = arith.constant 0.000000e+00 : f32
    %42 = vector.shape_cast %40 : vector<8x1xi1> to vector<8x1xi1>
    %43 = vector.broadcast %42 : vector<8x1xi1> to vector<8x128xi1>
    %44 = vector.broadcast %cst_19 : f32 to vector<8x128xf32>
    %45 = arith.select %43, %41, %44 : vector<8x128xi1>, vector<8x128xf32>
    %46 = vector.broadcast %38 : vector<1x128xf32> to vector<8x128xf32>
    %47 = arith.mulf %45, %46 : vector<8x128xf32>
    %48 = arith.addf %37, %47 : vector<8x128xf32>
    %c0_20 = arith.constant 0 : index
    %c0_21 = arith.constant 0 : index
    %49 = vector.load %arg4[%c0_20, %c0_21] : memref<4x128xf32, #tpu.memory_space<vmem>>, vector<1x128xf32>
    %c3_i32 = arith.constant 3 : i32
    %50 = vector.broadcast %c3_i32 : i32 to vector<8x1xi32>
    %51 = arith.cmpi sge, %20, %50 : vector<8x1xi32>
    %c3_i32_22 = arith.constant 3 : i32
    %52 = tpu.dynamic_rotate %17 by %c3_i32_22 dim 0 : vector<8x128xf32>, i32 -> vector<8x128xf32>
    %cst_23 = arith.constant 0.000000e+00 : f32
    %53 = vector.shape_cast %51 : vector<8x1xi1> to vector<8x1xi1>
    %54 = vector.broadcast %53 : vector<8x1xi1> to vector<8x128xi1>
    %55 = vector.broadcast %cst_23 : f32 to vector<8x128xf32>
    %56 = arith.select %54, %52, %55 : vector<8x128xi1>, vector<8x128xf32>
    %57 = vector.broadcast %49 : vector<1x128xf32> to vector<8x128xf32>
    %58 = arith.mulf %56, %57 : vector<8x128xf32>
    %59 = arith.addf %48, %58 : vector<8x128xf32>
    %60 = arith.negf %59 : vector<8x128xf32>
    %61 = math.exp %60 : vector<8x128xf32>
    %cst_24 = arith.constant 1.000000e+00 : f32
    %62 = vector.broadcast %cst_24 : f32 to vector<8x128xf32>
    %63 = arith.addf %62, %61 : vector<8x128xf32>
    %64 = arith.divf %62, %63 : vector<8x128xf32>
    %65 = arith.mulf %59, %64 : vector<8x128xf32>
    %c0_25 = arith.constant 0 : index
    %c0_26 = arith.constant 0 : index
    %66 = vector.load %arg6[%c0_25, %c0_26] : memref<128x160xf32, #tpu.memory_space<vmem>>, vector<128x160xf32>
    %cst_27 = arith.constant dense<0.000000e+00> : vector<8x160xf32>
    %67 = tpu.matmul %65, %66, %cst_27 {dimension_numbers = #tpu.dot_dimension_numbers<[1], [0], [0], [1], [0, 0, 1, 1], [], []>} : vector<8x128xf32>, vector<128x160xf32>, vector<8x160xf32> -> vector<8x160xf32>
    %68 = vector.extract_strided_slice %67 {offsets = [0, 0], sizes = [8, 128], strides = [1, 1]} : vector<8x160xf32> to vector<8x128xf32>
    %c0_28 = arith.constant 0 : index
    %c0_29 = arith.constant 0 : index
    %69 = vector.load %arg7[%c0_28, %c0_29] : memref<1x128xf32, #tpu.memory_space<vmem>>, vector<1x128xf32>
    %70 = vector.broadcast %69 : vector<1x128xf32> to vector<8x128xf32>
    %71 = arith.addf %68, %70 : vector<8x128xf32>
    %cst_30 = arith.constant 0.000000e+00 : f32
    %72 = vector.broadcast %cst_30 : f32 to vector<8x128xf32>
    %73 = arith.maximumf %71, %72 : vector<8x128xf32>
    %74 = vector.broadcast %cst_30 : f32 to vector<8x128xf32>
    %75 = arith.subf %71, %74 : vector<8x128xf32>
    %76 = arith.cmpf one, %75, %75 : vector<8x128xf32>
    %77 = vector.broadcast %cst_30 : f32 to vector<8x128xf32>
    %78 = arith.addf %71, %77 : vector<8x128xf32>
    %79 = math.absf %75 : vector<8x128xf32>
    %cst_31 = arith.constant 0.000000e+00 : f32
    %80 = vector.broadcast %cst_31 : f32 to vector<8x128xf32>
    %81 = arith.subf %80, %79 : vector<8x128xf32>
    %82 = math.exp %81 : vector<8x128xf32>
    %83 = math.log1p %82 : vector<8x128xf32>
    %84 = arith.addf %73, %83 : vector<8x128xf32>
    %85 = arith.select %76, %78, %84 : vector<8x128xi1>, vector<8x128xf32>
    %c0_32 = arith.constant 0 : index
    %c0_33 = arith.constant 0 : index
    %86 = vector.load %arg13[%c0_32, %c0_33] : memref<8x128xf32, #tpu.memory_space<vmem>>, vector<8x128xf32>
    tpu.vector_store %arg13[%c0_32, %c0_33], %85 {strides = array<i32>} : memref<8x128xf32, #tpu.memory_space<vmem>>, vector<8x128xf32>,
    %87 = arith.mulf %85, %65 : vector<8x128xf32>
    %c0_34 = arith.constant 0 : index
    %c0_35 = arith.constant 0 : index
    %88 = vector.load %arg14[%c0_34, %c0_35] : memref<8x128xf32, #tpu.memory_space<vmem>>, vector<8x128xf32>
    tpu.vector_store %arg14[%c0_34, %c0_35], %87 {strides = array<i32>} : memref<8x128xf32, #tpu.memory_space<vmem>>, vector<8x128xf32>,
    %89 = vector.extract_strided_slice %67 {offsets = [0, 128], sizes = [8, 32], strides = [1, 1]} : vector<8x160xf32> to vector<8x32xf32>
    %c0_36 = arith.constant 0 : index
    %c0_37 = arith.constant 0 : index
    %90 = vector.load %arg15[%c0_36, %c0_37] : memref<8x32xf32, #tpu.memory_space<vmem>>, vector<8x32xf32>
    tpu.vector_store %arg15[%c0_36, %c0_37], %89 {strides = array<i32>} : memref<8x32xf32, #tpu.memory_space<vmem>>, vector<8x32xf32>,
    %c0_38 = arith.constant 0 : index
    %c0_39 = arith.constant 0 : index
    %91 = vector.load %arg9[%c0_38, %c0_39] : memref<1x128xf32, #tpu.memory_space<vmem>>, vector<1x128xf32>
    %92 = vector.broadcast %91 : vector<1x128xf32> to vector<8x128xf32>
    %93 = arith.mulf %65, %92 : vector<8x128xf32>
    %c0_40 = arith.constant 0 : index
    %c0_41 = arith.constant 0 : index
    %94 = vector.load %arg16[%c0_40, %c0_41] : memref<8x128xf32, #tpu.memory_space<vmem>>, vector<8x128xf32>
    tpu.vector_store %arg16[%c0_40, %c0_41], %93 {strides = array<i32>} : memref<8x128xf32, #tpu.memory_space<vmem>>, vector<8x128xf32>,
    %c0_42 = arith.constant 0 : index
    %c0_43 = arith.constant 0 : index
    %95 = vector.load %arg8[%c0_42, %c0_43] : memref<16x128xf32, #tpu.memory_space<vmem>>, vector<16x128xf32>
    %cst_44 = arith.constant 0.000000e+00 : f32
    %96 = vector.broadcast %cst_44 : f32 to vector<16x128xf32>
    %c0_i32 = arith.constant 0 : i32
    %c8_i32 = arith.constant 8 : i32
    %97 = arith.muli %c0_i32, %c8_i32 : i32
    %c0_i32_45 = arith.constant 0 : i32
    %98 = arith.addi %c0_i32_45, %97 : i32
    %99 = tpu.assume_multiple %98, 8 : i32
    %100 = arith.index_cast %99 : i32 to index
    %c0_46 = arith.constant 0 : index
    %101 = vector.load %arg13[%100, %c0_46] : memref<8x128xf32, #tpu.memory_space<vmem>>, vector<8x128xf32>
    %102 = arith.index_cast %99 : i32 to index
    %c0_47 = arith.constant 0 : index
    %103 = vector.load %arg14[%102, %c0_47] : memref<8x128xf32, #tpu.memory_space<vmem>>, vector<8x128xf32>
    %104 = arith.index_cast %99 : i32 to index
    %c0_48 = arith.constant 0 : index
    %105 = vector.load %arg15[%104, %c0_48] : memref<8x32xf32, #tpu.memory_space<vmem>>, vector<8x32xf32>
    %106 = vector.extract_strided_slice %105 {offsets = [0, 0], sizes = [8, 16], strides = [1, 1]} : vector<8x32xf32> to vector<8x16xf32>
    %107 = tpu.transpose %106, [1, 0] : vector<8x16xf32> -> vector<16x8xf32>
    %108 = vector.extract_strided_slice %105 {offsets = [0, 16], sizes = [8, 16], strides = [1, 1]} : vector<8x32xf32> to vector<8x16xf32>
    %109 = tpu.transpose %108, [1, 0] : vector<8x16xf32> -> vector<16x8xf32>
    %110 = vector.extract_strided_slice %101 {offsets = [0, 0], sizes = [1, 128], strides = [1, 1]} : vector<8x128xf32> to vector<1x128xf32>
    %111 = vector.broadcast %110 : vector<1x128xf32> to vector<16x128xf32>
    %112 = arith.mulf %111, %95 : vector<16x128xf32>
    %113 = math.exp %112 : vector<16x128xf32>
    %c0_49 = arith.constant 0 : index
    %c0_50 = arith.constant 0 : index
    %114 = vector.load %arg17[%c0_49, %c0_50] : memref<128x128xf32, #tpu.memory_space<vmem>>, vector<16x128xf32>
    tpu.vector_store %arg17[%c0_49, %c0_50], %113 {strides = array<i32>} : memref<128x128xf32, #tpu.memory_space<vmem>>, vector<16x128xf32>,
    %115 = vector.extract_strided_slice %103 {offsets = [0, 0], sizes = [1, 128], strides = [1, 1]} : vector<8x128xf32> to vector<1x128xf32>
    %116 = vector.extract_strided_slice %107 {offsets = [0, 0], sizes = [16, 1], strides = [1, 1]} : vector<16x8xf32> to vector<16x1xf32>
    %117 = vector.broadcast %115 : vector<1x128xf32> to vector<16x128xf32>
    %118 = vector.broadcast %116 : vector<16x1xf32> to vector<16x128xf32>
    %119 = arith.mulf %117, %118 : vector<16x128xf32>
    %c0_51 = arith.constant 0 : index
    %c0_52 = arith.constant 0 : index
    %120 = vector.load %arg18[%c0_51, %c0_52] : memref<128x128xf32, #tpu.memory_space<vmem>>, vector<16x128xf32>
    tpu.vector_store %arg18[%c0_51, %c0_52], %119 {strides = array<i32>} : memref<128x128xf32, #tpu.memory_space<vmem>>, vector<16x128xf32>,
    %121 = vector.extract_strided_slice %101 {offsets = [1, 0], sizes = [1, 128], strides = [1, 1]} : vector<8x128xf32> to vector<1x128xf32>
    %122 = vector.broadcast %121 : vector<1x128xf32> to vector<16x128xf32>
    %123 = arith.mulf %122, %95 : vector<16x128xf32>
    %124 = math.exp %123 : vector<16x128xf32>
    %c16 = arith.constant 16 : index
    %c0_53 = arith.constant 0 : index
    %125 = vector.load %arg17[%c16, %c0_53] : memref<128x128xf32, #tpu.memory_space<vmem>>, vector<16x128xf32>
    tpu.vector_store %arg17[%c16, %c0_53], %124 {strides = array<i32>} : memref<128x128xf32, #tpu.memory_space<vmem>>, vector<16x128xf32>,
    %126 = vector.extract_strided_slice %103 {offsets = [1, 0], sizes = [1, 128], strides = [1, 1]} : vector<8x128xf32> to vector<1x128xf32>
    %127 = vector.extract_strided_slice %107 {offsets = [0, 1], sizes = [16, 1], strides = [1, 1]} : vector<16x8xf32> to vector<16x1xf32>
    %128 = vector.broadcast %126 : vector<1x128xf32> to vector<16x128xf32>
    %129 = vector.broadcast %127 : vector<16x1xf32> to vector<16x128xf32>
    %130 = arith.mulf %128, %129 : vector<16x128xf32>
    %c16_54 = arith.constant 16 : index
    %c0_55 = arith.constant 0 : index
    %131 = vector.load %arg18[%c16_54, %c0_55] : memref<128x128xf32, #tpu.memory_space<vmem>>, vector<16x128xf32>
    tpu.vector_store %arg18[%c16_54, %c0_55], %130 {strides = array<i32>} : memref<128x128xf32, #tpu.memory_space<vmem>>, vector<16x128xf32>,
    %132 = vector.extract_strided_slice %101 {offsets = [2, 0], sizes = [1, 128], strides = [1, 1]} : vector<8x128xf32> to vector<1x128xf32>
    %133 = vector.broadcast %132 : vector<1x128xf32> to vector<16x128xf32>
    %134 = arith.mulf %133, %95 : vector<16x128xf32>
    %135 = math.exp %134 : vector<16x128xf32>
    %c32 = arith.constant 32 : index
    %c0_56 = arith.constant 0 : index
    %136 = vector.load %arg17[%c32, %c0_56] : memref<128x128xf32, #tpu.memory_space<vmem>>, vector<16x128xf32>
    tpu.vector_store %arg17[%c32, %c0_56], %135 {strides = array<i32>} : memref<128x128xf32, #tpu.memory_space<vmem>>, vector<16x128xf32>,
    %137 = vector.extract_strided_slice %103 {offsets = [2, 0], sizes = [1, 128], strides = [1, 1]} : vector<8x128xf32> to vector<1x128xf32>
    %138 = vector.extract_strided_slice %107 {offsets = [0, 2], sizes = [16, 1], strides = [1, 1]} : vector<16x8xf32> to vector<16x1xf32>
    %139 = vector.broadcast %137 : vector<1x128xf32> to vector<16x128xf32>
    %140 = vector.broadcast %138 : vector<16x1xf32> to vector<16x128xf32>
    %141 = arith.mulf %139, %140 : vector<16x128xf32>
    %c32_57 = arith.constant 32 : index
    %c0_58 = arith.constant 0 : index
    %142 = vector.load %arg18[%c32_57, %c0_58] : memref<128x128xf32, #tpu.memory_space<vmem>>, vector<16x128xf32>
    tpu.vector_store %arg18[%c32_57, %c0_58], %141 {strides = array<i32>} : memref<128x128xf32, #tpu.memory_space<vmem>>, vector<16x128xf32>,
    %143 = vector.extract_strided_slice %101 {offsets = [3, 0], sizes = [1, 128], strides = [1, 1]} : vector<8x128xf32> to vector<1x128xf32>
    %144 = vector.broadcast %143 : vector<1x128xf32> to vector<16x128xf32>
    %145 = arith.mulf %144, %95 : vector<16x128xf32>
    %146 = math.exp %145 : vector<16x128xf32>
    %c48 = arith.constant 48 : index
    %c0_59 = arith.constant 0 : index
    %147 = vector.load %arg17[%c48, %c0_59] : memref<128x128xf32, #tpu.memory_space<vmem>>, vector<16x128xf32>
    tpu.vector_store %arg17[%c48, %c0_59], %146 {strides = array<i32>} : memref<128x128xf32, #tpu.memory_space<vmem>>, vector<16x128xf32>,
    %148 = vector.extract_strided_slice %103 {offsets = [3, 0], sizes = [1, 128], strides = [1, 1]} : vector<8x128xf32> to vector<1x128xf32>
    %149 = vector.extract_strided_slice %107 {offsets = [0, 3], sizes = [16, 1], strides = [1, 1]} : vector<16x8xf32> to vector<16x1xf32>
    %150 = vector.broadcast %148 : vector<1x128xf32> to vector<16x128xf32>
    %151 = vector.broadcast %149 : vector<16x1xf32> to vector<16x128xf32>
    %152 = arith.mulf %150, %151 : vector<16x128xf32>
    %c48_60 = arith.constant 48 : index
    %c0_61 = arith.constant 0 : index
    %153 = vector.load %arg18[%c48_60, %c0_61] : memref<128x128xf32, #tpu.memory_space<vmem>>, vector<16x128xf32>
    tpu.vector_store %arg18[%c48_60, %c0_61], %152 {strides = array<i32>} : memref<128x128xf32, #tpu.memory_space<vmem>>, vector<16x128xf32>,
    %154 = vector.extract_strided_slice %101 {offsets = [4, 0], sizes = [1, 128], strides = [1, 1]} : vector<8x128xf32> to vector<1x128xf32>
    %155 = vector.broadcast %154 : vector<1x128xf32> to vector<16x128xf32>
    %156 = arith.mulf %155, %95 : vector<16x128xf32>
    %157 = math.exp %156 : vector<16x128xf32>
    %c64 = arith.constant 64 : index
    %c0_62 = arith.constant 0 : index
    %158 = vector.load %arg17[%c64, %c0_62] : memref<128x128xf32, #tpu.memory_space<vmem>>, vector<16x128xf32>
    tpu.vector_store %arg17[%c64, %c0_62], %157 {strides = array<i32>} : memref<128x128xf32, #tpu.memory_space<vmem>>, vector<16x128xf32>,
    %159 = vector.extract_strided_slice %103 {offsets = [4, 0], sizes = [1, 128], strides = [1, 1]} : vector<8x128xf32> to vector<1x128xf32>
    %160 = vector.extract_strided_slice %107 {offsets = [0, 4], sizes = [16, 1], strides = [1, 1]} : vector<16x8xf32> to vector<16x1xf32>
    %161 = vector.broadcast %159 : vector<1x128xf32> to vector<16x128xf32>
    %162 = vector.broadcast %160 : vector<16x1xf32> to vector<16x128xf32>
    %163 = arith.mulf %161, %162 : vector<16x128xf32>
    %c64_63 = arith.constant 64 : index
    %c0_64 = arith.constant 0 : index
    %164 = vector.load %arg18[%c64_63, %c0_64] : memref<128x128xf32, #tpu.memory_space<vmem>>, vector<16x128xf32>
    tpu.vector_store %arg18[%c64_63, %c0_64], %163 {strides = array<i32>} : memref<128x128xf32, #tpu.memory_space<vmem>>, vector<16x128xf32>,
    %165 = vector.extract_strided_slice %101 {offsets = [5, 0], sizes = [1, 128], strides = [1, 1]} : vector<8x128xf32> to vector<1x128xf32>
    %166 = vector.broadcast %165 : vector<1x128xf32> to vector<16x128xf32>
    %167 = arith.mulf %166, %95 : vector<16x128xf32>
    %168 = math.exp %167 : vector<16x128xf32>
    %c80 = arith.constant 80 : index
    %c0_65 = arith.constant 0 : index
    %169 = vector.load %arg17[%c80, %c0_65] : memref<128x128xf32, #tpu.memory_space<vmem>>, vector<16x128xf32>
    tpu.vector_store %arg17[%c80, %c0_65], %168 {strides = array<i32>} : memref<128x128xf32, #tpu.memory_space<vmem>>, vector<16x128xf32>,
    %170 = vector.extract_strided_slice %103 {offsets = [5, 0], sizes = [1, 128], strides = [1, 1]} : vector<8x128xf32> to vector<1x128xf32>
    %171 = vector.extract_strided_slice %107 {offsets = [0, 5], sizes = [16, 1], strides = [1, 1]} : vector<16x8xf32> to vector<16x1xf32>
    %172 = vector.broadcast %170 : vector<1x128xf32> to vector<16x128xf32>
    %173 = vector.broadcast %171 : vector<16x1xf32> to vector<16x128xf32>
    %174 = arith.mulf %172, %173 : vector<16x128xf32>
    %c80_66 = arith.constant 80 : index
    %c0_67 = arith.constant 0 : index
    %175 = vector.load %arg18[%c80_66, %c0_67] : memref<128x128xf32, #tpu.memory_space<vmem>>, vector<16x128xf32>
    tpu.vector_store %arg18[%c80_66, %c0_67], %174 {strides = array<i32>} : memref<128x128xf32, #tpu.memory_space<vmem>>, vector<16x128xf32>,
    %176 = vector.extract_strided_slice %101 {offsets = [6, 0], sizes = [1, 128], strides = [1, 1]} : vector<8x128xf32> to vector<1x128xf32>
    %177 = vector.broadcast %176 : vector<1x128xf32> to vector<16x128xf32>
    %178 = arith.mulf %177, %95 : vector<16x128xf32>
    %179 = math.exp %178 : vector<16x128xf32>
    %c96 = arith.constant 96 : index
    %c0_68 = arith.constant 0 : index
    %180 = vector.load %arg17[%c96, %c0_68] : memref<128x128xf32, #tpu.memory_space<vmem>>, vector<16x128xf32>
    tpu.vector_store %arg17[%c96, %c0_68], %179 {strides = array<i32>} : memref<128x128xf32, #tpu.memory_space<vmem>>, vector<16x128xf32>,
    %181 = vector.extract_strided_slice %103 {offsets = [6, 0], sizes = [1, 128], strides = [1, 1]} : vector<8x128xf32> to vector<1x128xf32>
    %182 = vector.extract_strided_slice %107 {offsets = [0, 6], sizes = [16, 1], strides = [1, 1]} : vector<16x8xf32> to vector<16x1xf32>
    %183 = vector.broadcast %181 : vector<1x128xf32> to vector<16x128xf32>
    %184 = vector.broadcast %182 : vector<16x1xf32> to vector<16x128xf32>
    %185 = arith.mulf %183, %184 : vector<16x128xf32>
    %c96_69 = arith.constant 96 : index
    %c0_70 = arith.constant 0 : index
    %186 = vector.load %arg18[%c96_69, %c0_70] : memref<128x128xf32, #tpu.memory_space<vmem>>, vector<16x128xf32>
    tpu.vector_store %arg18[%c96_69, %c0_70], %185 {strides = array<i32>} : memref<128x128xf32, #tpu.memory_space<vmem>>, vector<16x128xf32>,
    %187 = vector.extract_strided_slice %101 {offsets = [7, 0], sizes = [1, 128], strides = [1, 1]} : vector<8x128xf32> to vector<1x128xf32>
    %188 = vector.broadcast %187 : vector<1x128xf32> to vector<16x128xf32>
    %189 = arith.mulf %188, %95 : vector<16x128xf32>
    %190 = math.exp %189 : vector<16x128xf32>
    %c112 = arith.constant 112 : index
    %c0_71 = arith.constant 0 : index
    %191 = vector.load %arg17[%c112, %c0_71] : memref<128x128xf32, #tpu.memory_space<vmem>>, vector<16x128xf32>
    tpu.vector_store %arg17[%c112, %c0_71], %190 {strides = array<i32>} : memref<128x128xf32, #tpu.memory_space<vmem>>, vector<16x128xf32>,
    %192 = vector.extract_strided_slice %103 {offsets = [7, 0], sizes = [1, 128], strides = [1, 1]} : vector<8x128xf32> to vector<1x128xf32>
    %193 = vector.extract_strided_slice %107 {offsets = [0, 7], sizes = [16, 1], strides = [1, 1]} : vector<16x8xf32> to vector<16x1xf32>
    %194 = vector.broadcast %192 : vector<1x128xf32> to vector<16x128xf32>
    %195 = vector.broadcast %193 : vector<16x1xf32> to vector<16x128xf32>
    %196 = arith.mulf %194, %195 : vector<16x128xf32>
    %c112_72 = arith.constant 112 : index
    %c0_73 = arith.constant 0 : index
    %197 = vector.load %arg18[%c112_72, %c0_73] : memref<128x128xf32, #tpu.memory_space<vmem>>, vector<16x128xf32>
    tpu.vector_store %arg18[%c112_72, %c0_73], %196 {strides = array<i32>} : memref<128x128xf32, #tpu.memory_space<vmem>>, vector<16x128xf32>,
    %c0_74 = arith.constant 0 : index
    %c0_75 = arith.constant 0 : index
    %198 = vector.load %arg17[%c0_74, %c0_75] : memref<128x128xf32, #tpu.memory_space<vmem>>, vector<16x128xf32>
    %199 = arith.mulf %198, %96 : vector<16x128xf32>
    %c0_76 = arith.constant 0 : index
    %c0_77 = arith.constant 0 : index
    %200 = vector.load %arg18[%c0_76, %c0_77] : memref<128x128xf32, #tpu.memory_space<vmem>>, vector<16x128xf32>
    %201 = arith.addf %199, %200 : vector<16x128xf32>
    %202 = vector.extract_strided_slice %109 {offsets = [0, 0], sizes = [16, 1], strides = [1, 1]} : vector<16x8xf32> to vector<16x1xf32>
    %203 = vector.broadcast %202 : vector<16x1xf32> to vector<16x128xf32>
    %204 = arith.mulf %201, %203 : vector<16x128xf32>
    %cst_78 = arith.constant dense<0.000000e+00> : vector<128xf32>
    %205 = vector.multi_reduction <add>, %204, %cst_78 [0] : vector<16x128xf32> to vector<128xf32>
    %206 = vector.shape_cast %205 : vector<128xf32> to vector<1x128xf32>
    %c16_79 = arith.constant 16 : index
    %c0_80 = arith.constant 0 : index
    %207 = vector.load %arg17[%c16_79, %c0_80] : memref<128x128xf32, #tpu.memory_space<vmem>>, vector<16x128xf32>
    %208 = arith.mulf %207, %201 : vector<16x128xf32>
    %c16_81 = arith.constant 16 : index
    %c0_82 = arith.constant 0 : index
    %209 = vector.load %arg18[%c16_81, %c0_82] : memref<128x128xf32, #tpu.memory_space<vmem>>, vector<16x128xf32>
    %210 = arith.addf %208, %209 : vector<16x128xf32>
    %211 = vector.extract_strided_slice %109 {offsets = [0, 1], sizes = [16, 1], strides = [1, 1]} : vector<16x8xf32> to vector<16x1xf32>
    %212 = vector.broadcast %211 : vector<16x1xf32> to vector<16x128xf32>
    %213 = arith.mulf %210, %212 : vector<16x128xf32>
    %cst_83 = arith.constant dense<0.000000e+00> : vector<128xf32>
    %214 = vector.multi_reduction <add>, %213, %cst_83 [0] : vector<16x128xf32> to vector<128xf32>
    %215 = vector.shape_cast %214 : vector<128xf32> to vector<1x128xf32>
    %c32_84 = arith.constant 32 : index
    %c0_85 = arith.constant 0 : index
    %216 = vector.load %arg17[%c32_84, %c0_85] : memref<128x128xf32, #tpu.memory_space<vmem>>, vector<16x128xf32>
    %217 = arith.mulf %216, %210 : vector<16x128xf32>
    %c32_86 = arith.constant 32 : index
    %c0_87 = arith.constant 0 : index
    %218 = vector.load %arg18[%c32_86, %c0_87] : memref<128x128xf32, #tpu.memory_space<vmem>>, vector<16x128xf32>
    %219 = arith.addf %217, %218 : vector<16x128xf32>
    %220 = vector.extract_strided_slice %109 {offsets = [0, 2], sizes = [16, 1], strides = [1, 1]} : vector<16x8xf32> to vector<16x1xf32>
    %221 = vector.broadcast %220 : vector<16x1xf32> to vector<16x128xf32>
    %222 = arith.mulf %219, %221 : vector<16x128xf32>
    %cst_88 = arith.constant dense<0.000000e+00> : vector<128xf32>
    %223 = vector.multi_reduction <add>, %222, %cst_88 [0] : vector<16x128xf32> to vector<128xf32>
    %224 = vector.shape_cast %223 : vector<128xf32> to vector<1x128xf32>
    %c48_89 = arith.constant 48 : index
    %c0_90 = arith.constant 0 : index
    %225 = vector.load %arg17[%c48_89, %c0_90] : memref<128x128xf32, #tpu.memory_space<vmem>>, vector<16x128xf32>
    %226 = arith.mulf %225, %219 : vector<16x128xf32>
    %c48_91 = arith.constant 48 : index
    %c0_92 = arith.constant 0 : index
    %227 = vector.load %arg18[%c48_91, %c0_92] : memref<128x128xf32, #tpu.memory_space<vmem>>, vector<16x128xf32>
    %228 = arith.addf %226, %227 : vector<16x128xf32>
    %229 = vector.extract_strided_slice %109 {offsets = [0, 3], sizes = [16, 1], strides = [1, 1]} : vector<16x8xf32> to vector<16x1xf32>
    %230 = vector.broadcast %229 : vector<16x1xf32> to vector<16x128xf32>
    %231 = arith.mulf %228, %230 : vector<16x128xf32>
    %cst_93 = arith.constant dense<0.000000e+00> : vector<128xf32>
    %232 = vector.multi_reduction <add>, %231, %cst_93 [0] : vector<16x128xf32> to vector<128xf32>
    %233 = vector.shape_cast %232 : vector<128xf32> to vector<1x128xf32>
    %c64_94 = arith.constant 64 : index
    %c0_95 = arith.constant 0 : index
    %234 = vector.load %arg17[%c64_94, %c0_95] : memref<128x128xf32, #tpu.memory_space<vmem>>, vector<16x128xf32>
    %235 = arith.mulf %234, %228 : vector<16x128xf32>
    %c64_96 = arith.constant 64 : index
    %c0_97 = arith.constant 0 : index
    %236 = vector.load %arg18[%c64_96, %c0_97] : memref<128x128xf32, #tpu.memory_space<vmem>>, vector<16x128xf32>
    %237 = arith.addf %235, %236 : vector<16x128xf32>
    %238 = vector.extract_strided_slice %109 {offsets = [0, 4], sizes = [16, 1], strides = [1, 1]} : vector<16x8xf32> to vector<16x1xf32>
    %239 = vector.broadcast %238 : vector<16x1xf32> to vector<16x128xf32>
    %240 = arith.mulf %237, %239 : vector<16x128xf32>
    %cst_98 = arith.constant dense<0.000000e+00> : vector<128xf32>
    %241 = vector.multi_reduction <add>, %240, %cst_98 [0] : vector<16x128xf32> to vector<128xf32>
    %242 = vector.shape_cast %241 : vector<128xf32> to vector<1x128xf32>
    %c80_99 = arith.constant 80 : index
    %c0_100 = arith.constant 0 : index
    %243 = vector.load %arg17[%c80_99, %c0_100] : memref<128x128xf32, #tpu.memory_space<vmem>>, vector<16x128xf32>
    %244 = arith.mulf %243, %237 : vector<16x128xf32>
    %c80_101 = arith.constant 80 : index
    %c0_102 = arith.constant 0 : index
    %245 = vector.load %arg18[%c80_101, %c0_102] : memref<128x128xf32, #tpu.memory_space<vmem>>, vector<16x128xf32>
    %246 = arith.addf %244, %245 : vector<16x128xf32>
    %247 = vector.extract_strided_slice %109 {offsets = [0, 5], sizes = [16, 1], strides = [1, 1]} : vector<16x8xf32> to vector<16x1xf32>
    %248 = vector.broadcast %247 : vector<16x1xf32> to vector<16x128xf32>
    %249 = arith.mulf %246, %248 : vector<16x128xf32>
    %cst_103 = arith.constant dense<0.000000e+00> : vector<128xf32>
    %250 = vector.multi_reduction <add>, %249, %cst_103 [0] : vector<16x128xf32> to vector<128xf32>
    %251 = vector.shape_cast %250 : vector<128xf32> to vector<1x128xf32>
    %c96_104 = arith.constant 96 : index
    %c0_105 = arith.constant 0 : index
    %252 = vector.load %arg17[%c96_104, %c0_105] : memref<128x128xf32, #tpu.memory_space<vmem>>, vector<16x128xf32>
    %253 = arith.mulf %252, %246 : vector<16x128xf32>
    %c96_106 = arith.constant 96 : index
    %c0_107 = arith.constant 0 : index
    %254 = vector.load %arg18[%c96_106, %c0_107] : memref<128x128xf32, #tpu.memory_space<vmem>>, vector<16x128xf32>
    %255 = arith.addf %253, %254 : vector<16x128xf32>
    %256 = vector.extract_strided_slice %109 {offsets = [0, 6], sizes = [16, 1], strides = [1, 1]} : vector<16x8xf32> to vector<16x1xf32>
    %257 = vector.broadcast %256 : vector<16x1xf32> to vector<16x128xf32>
    %258 = arith.mulf %255, %257 : vector<16x128xf32>
    %cst_108 = arith.constant dense<0.000000e+00> : vector<128xf32>
    %259 = vector.multi_reduction <add>, %258, %cst_108 [0] : vector<16x128xf32> to vector<128xf32>
    %260 = vector.shape_cast %259 : vector<128xf32> to vector<1x128xf32>
    %c112_109 = arith.constant 112 : index
    %c0_110 = arith.constant 0 : index
    %261 = vector.load %arg17[%c112_109, %c0_110] : memref<128x128xf32, #tpu.memory_space<vmem>>, vector<16x128xf32>
    %262 = arith.mulf %261, %255 : vector<16x128xf32>
    %c112_111 = arith.constant 112 : index
    %c0_112 = arith.constant 0 : index
    %263 = vector.load %arg18[%c112_111, %c0_112] : memref<128x128xf32, #tpu.memory_space<vmem>>, vector<16x128xf32>
    %264 = arith.addf %262, %263 : vector<16x128xf32>
    %265 = vector.extract_strided_slice %109 {offsets = [0, 7], sizes = [16, 1], strides = [1, 1]} : vector<16x8xf32> to vector<16x1xf32>
    %266 = vector.broadcast %265 : vector<16x1xf32> to vector<16x128xf32>
    %267 = arith.mulf %264, %266 : vector<16x128xf32>
    %cst_113 = arith.constant dense<0.000000e+00> : vector<128xf32>
    %268 = vector.multi_reduction <add>, %267, %cst_113 [0] : vector<16x128xf32> to vector<128xf32>
    %269 = vector.shape_cast %268 : vector<128xf32> to vector<1x128xf32>
    %270 = arith.index_cast %99 : i32 to index
    %c0_114 = arith.constant 0 : index
    %271 = vector.load %arg16[%270, %c0_114] : memref<8x128xf32, #tpu.memory_space<vmem>>, vector<8x128xf32>
    %272 = tpu.concatenate %206, %215, %224, %233, %242, %251, %260, %269 in 0 : vector<1x128xf32>, vector<1x128xf32>, vector<1x128xf32>, vector<1x128xf32>, vector<1x128xf32>, vector<1x128xf32>, vector<1x128xf32>, vector<1x128xf32> -> vector<8x128xf32>
    %273 = arith.addf %271, %272 : vector<8x128xf32>
    %274 = arith.index_cast %99 : i32 to index
    %c0_115 = arith.constant 0 : index
    %275 = vector.load %arg16[%274, %c0_115] : memref<8x128xf32, #tpu.memory_space<vmem>>, vector<8x128xf32>
    tpu.vector_store %arg16[%274, %c0_115], %273 {strides = array<i32>} : memref<8x128xf32, #tpu.memory_space<vmem>>, vector<8x128xf32>,
    %c1_i32_116 = arith.constant 1 : i32
    %c0_117 = arith.constant 0 : index
    %c0_118 = arith.constant 0 : index
    %276 = vector.load %arg12[%c0_117, %c0_118] : memref<8x128xf32, #tpu.memory_space<vmem>>, vector<8x128xf32>
    %c0_119 = arith.constant 0 : index
    %c0_120 = arith.constant 0 : index
    %277 = vector.load %arg16[%c0_119, %c0_120] : memref<8x128xf32, #tpu.memory_space<vmem>>, vector<8x128xf32>
    %278 = arith.negf %276 : vector<8x128xf32>
    %279 = math.exp %278 : vector<8x128xf32>
    %cst_121 = arith.constant 1.000000e+00 : f32
    %280 = vector.broadcast %cst_121 : f32 to vector<8x128xf32>
    %281 = arith.addf %280, %279 : vector<8x128xf32>
    %282 = arith.divf %280, %281 : vector<8x128xf32>
    %283 = arith.mulf %276, %282 : vector<8x128xf32>
    %284 = arith.mulf %277, %283 : vector<8x128xf32>
    %c0_122 = arith.constant 0 : index
    %c0_123 = arith.constant 0 : index
    %285 = vector.load %arg10[%c0_122, %c0_123] : memref<128x64xf32, #tpu.memory_space<vmem>>, vector<128x64xf32>
    %cst_124 = arith.constant dense<0.000000e+00> : vector<8x64xf32>
    %286 = tpu.matmul %284, %285, %cst_124 {dimension_numbers = #tpu.dot_dimension_numbers<[1], [0], [0], [1], [0, 0, 1, 1], [], []>} : vector<8x128xf32>, vector<128x64xf32>, vector<8x64xf32> -> vector<8x64xf32>
    %c0_125 = arith.constant 0 : index
    %c0_126 = arith.constant 0 : index
    %c0_127 = arith.constant 0 : index
    %287 = vector.load %arg1[%c0_125, %c0_126, %c0_127] : memref<1x8x64xf32, #tpu.memory_space<vmem>>, vector<1x8x64xf32>
    %288 = vector.shape_cast %286 : vector<8x64xf32> to vector<1x8x64xf32>
    %289 = arith.addf %287, %288 : vector<1x8x64xf32>
    %c0_128 = arith.constant 0 : index
    %c0_129 = arith.constant 0 : index
    %c0_130 = arith.constant 0 : index
    %290 = vector.load %arg11[%c0_128, %c0_129, %c0_130] : memref<1x8x64xf32, #tpu.memory_space<vmem>>, vector<1x8x64xf32>
    tpu.vector_store %arg11[%c0_128, %c0_129, %c0_130], %289 {strides = array<i32>} : memref<1x8x64xf32, #tpu.memory_space<vmem>>, vector<1x8x64xf32>,
    return
  }
  func.func @transform_0(%arg0: i32) -> (i32, i32, i32) {
    %c0_i32 = arith.constant 0 : i32
    %c0_i32_0 = arith.constant 0 : i32
    %c0_i32_1 = arith.constant 0 : i32
    return %arg0, %c0_i32, %c0_i32_0 : i32, i32, i32
  }
  func.func @transform_1(%arg0: i32) -> (i32, i32) {
    %c0_i32 = arith.constant 0 : i32
    %c0_i32_0 = arith.constant 0 : i32
    %c0_i32_1 = arith.constant 0 : i32
    return %c0_i32, %c0_i32_0 : i32, i32
  }
  func.func @transform_2(%arg0: i32) -> (i32, i32) {
    %c0_i32 = arith.constant 0 : i32
    %c0_i32_0 = arith.constant 0 : i32
    %c0_i32_1 = arith.constant 0 : i32
    return %c0_i32, %c0_i32_0 : i32, i32
  }
  func.func @transform_3(%arg0: i32) -> (i32, i32) {
    %c0_i32 = arith.constant 0 : i32
    %c0_i32_0 = arith.constant 0 : i32
    %c0_i32_1 = arith.constant 0 : i32
    return %c0_i32, %c0_i32_0 : i32, i32
  }
  func.func @transform_4(%arg0: i32) -> (i32, i32) {
    %c0_i32 = arith.constant 0 : i32
    %c0_i32_0 = arith.constant 0 : i32
    %c0_i32_1 = arith.constant 0 : i32
    return %c0_i32, %c0_i32_0 : i32, i32
  }
  func.func @transform_5(%arg0: i32) -> (i32, i32) {
    %c0_i32 = arith.constant 0 : i32
    %c0_i32_0 = arith.constant 0 : i32
    %c0_i32_1 = arith.constant 0 : i32
    return %c0_i32, %c0_i32_0 : i32, i32
  }
  func.func @transform_6(%arg0: i32) -> (i32, i32) {
    %c0_i32 = arith.constant 0 : i32
    %c0_i32_0 = arith.constant 0 : i32
    %c0_i32_1 = arith.constant 0 : i32
    return %c0_i32, %c0_i32_0 : i32, i32
  }
  func.func @transform_7(%arg0: i32) -> (i32, i32) {
    %c0_i32 = arith.constant 0 : i32
    %c0_i32_0 = arith.constant 0 : i32
    %c0_i32_1 = arith.constant 0 : i32
    return %c0_i32, %c0_i32_0 : i32, i32
  }
  func.func @transform_8(%arg0: i32) -> (i32, i32) {
    %c0_i32 = arith.constant 0 : i32
    %c0_i32_0 = arith.constant 0 : i32
    %c0_i32_1 = arith.constant 0 : i32
    return %c0_i32, %c0_i32_0 : i32, i32
  }
  func.func @transform_9(%arg0: i32) -> (i32, i32) {
    %c0_i32 = arith.constant 0 : i32
    %c0_i32_0 = arith.constant 0 : i32
    %c0_i32_1 = arith.constant 0 : i32
    return %c0_i32, %c0_i32_0 : i32, i32
  }
  func.func @transform_10(%arg0: i32) -> (i32, i32, i32) {
    %c0_i32 = arith.constant 0 : i32
    %c0_i32_0 = arith.constant 0 : i32
    %c0_i32_1 = arith.constant 0 : i32
    return %arg0, %c0_i32, %c0_i32_0 : i32, i32, i32
  }
}

</mosaic_0001>

<llo_original>
// kernel: _lambda_.1
$region0: #{_lambda_.1}
  #allocation0 [shape = 'u32[]', space=smem, size = 0x4, offset = 0x4, fixed_abs, tag = 'smem constant byte address 0x4 - core index']
  #allocation1 [shape = 'u32[144,128]{1,0:T(1,128)}', space=vmem, size = 0x12000, scoped, tag = 'internal scratch']
  #allocation2 [shape = 'f32[8,128]{1,0:T(8,128)}', space=vmem, size = 0x1000, scoped, tag = 'scratch operand']
  #allocation3 [shape = 'f32[8,128]{1,0:T(8,128)}', space=vmem, size = 0x1000, scoped, tag = 'scratch operand']
  #allocation4 [shape = 'f32[8,128]{1,0:T(8,128)}', space=vmem, size = 0x1000, scoped, tag = 'scratch operand']
  #allocation5 [shape = 'f32[8,32]{1,0:T(8,128)}', space=vmem, size = 0x1000, scoped, tag = 'scratch operand']
  #allocation6 [shape = 'f32[8,128]{1,0:T(8,128)}', space=vmem, size = 0x1000, scoped, tag = 'scratch operand']
  #allocation7 [shape = 'f32[128,128]{1,0:T(8,128)}', space=vmem, size = 0x10000, scoped, tag = 'scratch operand']
  #allocation8 [shape = 'f32[128,128]{1,0:T(8,128)}', space=vmem, size = 0x10000, scoped, tag = 'scratch operand']
  %s0 = inlined_call_operand.hbm [shape: f32[2,8,64], index: 0, kind: input, shape index: {}]
  %s1 = inlined_call_operand.vmem [shape: f32[1,64], index: 1, kind: input, shape index: {}]
  %s2 = inlined_call_operand.hbm [shape: f32[64,256], index: 2, kind: input, shape index: {}]
  %s3 = inlined_call_operand.vmem [shape: f32[4,128], index: 3, kind: input, shape index: {}]
  %s4 = inlined_call_operand.vmem [shape: f32[1,128], index: 4, kind: input, shape index: {}]
  %s5 = inlined_call_operand.hbm [shape: f32[128,160], index: 5, kind: input, shape index: {}]
  %s6 = inlined_call_operand.vmem [shape: f32[1,128], index: 6, kind: input, shape index: {}]
  %s7 = inlined_call_operand.hbm [shape: f32[16,128], index: 7, kind: input, shape index: {}]
  %s8 = inlined_call_operand.vmem [shape: f32[1,128], index: 8, kind: input, shape index: {}]
  %s9 = inlined_call_operand.hbm [shape: f32[128,64], index: 9, kind: input, shape index: {}]
  %s10 = inlined_call_operand.hbm [shape: f32[2,8,64], index: 10, kind: output, shape index: {}]
  %s11 = sld [smem:[#allocation0]]
  $region93: #{_lambda_.1} parent=0
    _
  %s13 = ssub.s32 1, %s11
  %s14 = scalar_select 0, %s13, %s11
  $region1: #{_lambda_.1} parent=0
    #allocation9 [shape = 'u8[8192]{0}', space=vmem, size = 0x2000, scoped, tag = 'input window, operand 0']
    #allocation10 [shape = 's32[2]{0}', space=sflag, size = 0x8, scoped, tag = 'scoped memory for _lambda_.1']
    #allocation11 [shape = 's32[2]{0}', space=sflag, size = 0x8, scoped, tag = 'scoped memory for _lambda_.1']
    #allocation12 [shape = 'u8[65536]{0}', space=vmem, size = 0x10000, scoped, tag = 'input window, operand 2, single buffered']
    #allocation13 [shape = 's32[1]{0}', space=sflag, size = 0x4, scoped, tag = 'scoped memory for _lambda_.1']
    #allocation14 [shape = 'u8[131072]{0}', space=vmem, size = 0x20000, scoped, tag = 'input window, operand 5, single buffered']
    #allocation15 [shape = 'u8[8192]{0}', space=vmem, size = 0x2000, scoped, tag = 'input window, operand 7, single buffered']
    #allocation16 [shape = 's32[1]{0}', space=sflag, size = 0x4, scoped, tag = 'scoped memory for _lambda_.1']
    #allocation17 [shape = 'u8[65536]{0}', space=vmem, size = 0x10000, scoped, tag = 'input window, operand 9, single buffered']
    #allocation18 [shape = 'u8[8192]{0}', space=vmem, size = 0x2000, scoped, tag = 'output window, operand 0']
    %15 = vsyncpa [#allocation10], 0
    %s16 = scalar_lea.sflag [#allocation10], 1
    %17 = vsyncpa %s16, 0
    %18 = vsyncpa [#allocation13], 0
    %19 = vsyncpa [#allocation16], 0
    %20 = vsyncpa [#allocation11], 0
    %s21 = scalar_lea.sflag [#allocation11], 1
    %22 = vsyncpa %s21, 0
    loop: start=0, step=1, limit=4
    $region2: #{_lambda_.1} parent=1 // loop_pre_header
      _
    $region3: #{_lambda_.1} parent=1 // loop_header
      %s24 = sphi 0, %s28
      %p25 = scmp.ge.s32.totalorder %s24, 4
      %s34 = sphi 0, %s36
      %s37 = sphi 0, %s34
      %s38 = sphi 0, %s37
      %s54 = sphi 0, %s38
      %s58 = sphi 0, %s58
      %s60 = sphi 0, %s58
      %s61 = sphi 0, %s60
      %s75 = sphi 0, %s61
      %s79 = sphi 0, %s79
      %s81 = sphi 0, %s79
      %s82 = sphi 0, %s81
      %s96 = sphi 0, %s82
      %s100 = sphi 0, %s100
      %s102 = sphi 0, %s100
      %s103 = sphi 0, %s102
      %s117 = sphi 0, %s103
      %s121 = sphi 0, %s121
      %s123 = sphi 0, %s121
      %s124 = sphi 0, %s123
      %s138 = sphi 0, %s124
      %s142 = sphi 0, %s142
      %s144 = sphi 0, %s142
      %s145 = sphi 0, %s144
      %s159 = sphi 0, %s145
      %s163 = sphi 0, %s163
      %s165 = sphi 0, %s163
      %s166 = sphi 0, %s165
      %s180 = sphi 0, %s166
      %s184 = sphi 0, %s184
      %s186 = sphi 0, %s184
      %s187 = sphi 0, %s186
      %s201 = sphi 0, %s187
      %s205 = sphi 0, %s205
      %s207 = sphi 0, %s205
      %s208 = sphi 0, %s207
      %s222 = sphi 0, %s208
      %s226 = sphi 0, %s226
      %s228 = sphi 0, %s226
      %s229 = sphi 0, %s228
      %s243 = sphi 0, %s229
      %s249 = sphi 0, %s251
      %s252 = sphi 0, %s249
      %s253 = sphi 0, %s252
      %s269 = sphi 0, %s253
    $region4: #{_lambda_.1} parent=1 // loop_header_branch
      %27 = sbr.rel (%p25) target = $region8
    $region5: #{_lambda_.1} parent=1 // loop_body
      %s29 = ssub.s32 %s24, 1
      %s30 = ssub.s32 %s24, 2
      %s31 = sadd.s32 %s24, 1
      %s32 = ssub.s32 %s24, %s31
      %p33 = scmp.eq.s32.totalorder %s32, 0
      %s35 = sadd.s32 %s34, 1
      %s36 = scalar_select %p33, %s34, %s35
      %p39 = pneg %p33
      %p40 = scmp.eq.s32.totalorder %s24, 1
      %p41 = por %p39, %p40
      %p42 = scmp.ne.s32.totalorder %s34, %s37
      %p43 = scmp.eq.s32.totalorder %s24, 0
      %p44 = por %p42, %p43
      %p45 = scmp.ne.s32.totalorder %s34, %s37
      %p46 = scmp.eq.s32.totalorder %s29, 1
      %p47 = por %p45, %p46
      %p48 = scmp.ne.s32.totalorder %s37, %s38
      %p49 = scmp.eq.s32.totalorder %s29, 0
      %p50 = por %p48, %p49
      %p51 = scmp.ne.s32.totalorder %s37, %s38
      %p52 = scmp.eq.s32.totalorder %s30, 1
      %p53 = por %p51, %p52
      %p55 = scmp.ne.s32.totalorder %s38, %s54
      %p56 = scmp.eq.s32.totalorder %s30, 0
      %p57 = por %p55, %p56
      %s59 = sadd.s32 %s58, 1
      %p62 = scmp.eq.s32.totalorder %s24, 1
      %p63 = scmp.ne.s32.totalorder %s58, %s60
      %p64 = scmp.eq.s32.totalorder %s24, 0
      %p65 = por %p63, %p64
      %p66 = scmp.ne.s32.totalorder %s58, %s60
      %p67 = scmp.eq.s32.totalorder %s29, 1
      %p68 = por %p66, %p67
      %p69 = scmp.ne.s32.totalorder %s60, %s61
      %p70 = scmp.eq.s32.totalorder %s29, 0
      %p71 = por %p69, %p70
      %p72 = scmp.ne.s32.totalorder %s60, %s61
      %p73 = scmp.eq.s32.totalorder %s30, 1
      %p74 = por %p72, %p73
      %p76 = scmp.ne.s32.totalorder %s61, %s75
      %p77 = scmp.eq.s32.totalorder %s30, 0
      %p78 = por %p76, %p77
      %s80 = sadd.s32 %s79, 1
      %p83 = scmp.eq.s32.totalorder %s24, 1
      %p84 = scmp.ne.s32.totalorder %s79, %s81
      %p85 = scmp.eq.s32.totalorder %s24, 0
      %p86 = por %p84, %p85
      %p87 = scmp.ne.s32.totalorder %s79, %s81
      %p88 = scmp.eq.s32.totalorder %s29, 1
      %p89 = por %p87, %p88
      %p90 = scmp.ne.s32.totalorder %s81, %s82
      %p91 = scmp.eq.s32.totalorder %s29, 0
      %p92 = por %p90, %p91
      %p93 = scmp.ne.s32.totalorder %s81, %s82
      %p94 = scmp.eq.s32.totalorder %s30, 1
      %p95 = por %p93, %p94
      %p97 = scmp.ne.s32.totalorder %s82, %s96
      %p98 = scmp.eq.s32.totalorder %s30, 0
      %p99 = por %p97, %p98
      %s101 = sadd.s32 %s100, 1
      %p104 = scmp.eq.s32.totalorder %s24, 1
      %p105 = scmp.ne.s32.totalorder %s100, %s102
      %p106 = scmp.eq.s32.totalorder %s24, 0
      %p107 = por %p105, %p106
      %p108 = scmp.ne.s32.totalorder %s100, %s102
      %p109 = scmp.eq.s32.totalorder %s29, 1
      %p110 = por %p108, %p109
      %p111 = scmp.ne.s32.totalorder %s102, %s103
      %p112 = scmp.eq.s32.totalorder %s29, 0
      %p113 = por %p111, %p112
      %p114 = scmp.ne.s32.totalorder %s102, %s103
      %p115 = scmp.eq.s32.totalorder %s30, 1
      %p116 = por %p114, %p115
      %p118 = scmp.ne.s32.totalorder %s103, %s117
      %p119 = scmp.eq.s32.totalorder %s30, 0
      %p120 = por %p118, %p119
      %s122 = sadd.s32 %s121, 1
      %p125 = scmp.eq.s32.totalorder %s24, 1
      %p126 = scmp.ne.s32.totalorder %s121, %s123
      %p127 = scmp.eq.s32.totalorder %s24, 0
      %p128 = por %p126, %p127
      %p129 = scmp.ne.s32.totalorder %s121, %s123
      %p130 = scmp.eq.s32.totalorder %s29, 1
      %p131 = por %p129, %p130
      %p132 = scmp.ne.s32.totalorder %s123, %s124
      %p133 = scmp.eq.s32.totalorder %s29, 0
      %p134 = por %p132, %p133
      %p135 = scmp.ne.s32.totalorder %s123, %s124
      %p136 = scmp.eq.s32.totalorder %s30, 1
      %p137 = por %p135, %p136
      %p139 = scmp.ne.s32.totalorder %s124, %s138
      %p140 = scmp.eq.s32.totalorder %s30, 0
      %p141 = por %p139, %p140
      %s143 = sadd.s32 %s142, 1
      %p146 = scmp.eq.s32.totalorder %s24, 1
      %p147 = scmp.ne.s32.totalorder %s142, %s144
      %p148 = scmp.eq.s32.totalorder %s24, 0
      %p149 = por %p147, %p148
      %p150 = scmp.ne.s32.totalorder %s142, %s144
      %p151 = scmp.eq.s32.totalorder %s29, 1
      %p152 = por %p150, %p151
      %p153 = scmp.ne.s32.totalorder %s144, %s145
      %p154 = scmp.eq.s32.totalorder %s29, 0
      %p155 = por %p153, %p154
      %p156 = scmp.ne.s32.totalorder %s144, %s145
      %p157 = scmp.eq.s32.totalorder %s30, 1
      %p158 = por %p156, %p157
      %p160 = scmp.ne.s32.totalorder %s145, %s159
      %p161 = scmp.eq.s32.totalorder %s30, 0
      %p162 = por %p160, %p161
      %s164 = sadd.s32 %s163, 1
      %p167 = scmp.eq.s32.totalorder %s24, 1
      %p168 = scmp.ne.s32.totalorder %s163, %s165
      %p169 = scmp.eq.s32.totalorder %s24, 0
      %p170 = por %p168, %p169
      %p171 = scmp.ne.s32.totalorder %s163, %s165
      %p172 = scmp.eq.s32.totalorder %s29, 1
      %p173 = por %p171, %p172
      %p174 = scmp.ne.s32.totalorder %s165, %s166
      %p175 = scmp.eq.s32.totalorder %s29, 0
      %p176 = por %p174, %p175
      %p177 = scmp.ne.s32.totalorder %s165, %s166
      %p178 = scmp.eq.s32.totalorder %s30, 1
      %p179 = por %p177, %p178
      %p181 = scmp.ne.s32.totalorder %s166, %s180
      %p182 = scmp.eq.s32.totalorder %s30, 0
      %p183 = por %p181, %p182
      %s185 = sadd.s32 %s184, 1
      %p188 = scmp.eq.s32.totalorder %s24, 1
      %p189 = scmp.ne.s32.totalorder %s184, %s186
      %p190 = scmp.eq.s32.totalorder %s24, 0
      %p191 = por %p189, %p190
      %p192 = scmp.ne.s32.totalorder %s184, %s186
      %p193 = scmp.eq.s32.totalorder %s29, 1
      %p194 = por %p192, %p193
      %p195 = scmp.ne.s32.totalorder %s186, %s187
      %p196 = scmp.eq.s32.totalorder %s29, 0
      %p197 = por %p195, %p196
      %p198 = scmp.ne.s32.totalorder %s186, %s187
      %p199 = scmp.eq.s32.totalorder %s30, 1
      %p200 = por %p198, %p199
      %p202 = scmp.ne.s32.totalorder %s187, %s201
      %p203 = scmp.eq.s32.totalorder %s30, 0
      %p204 = por %p202, %p203
      %s206 = sadd.s32 %s205, 1
      %p209 = scmp.eq.s32.totalorder %s24, 1
      %p210 = scmp.ne.s32.totalorder %s205, %s207
      %p211 = scmp.eq.s32.totalorder %s24, 0
      %p212 = por %p210, %p211
      %p213 = scmp.ne.s32.totalorder %s205, %s207
      %p214 = scmp.eq.s32.totalorder %s29, 1
      %p215 = por %p213, %p214
      %p216 = scmp.ne.s32.totalorder %s207, %s208
      %p217 = scmp.eq.s32.totalorder %s29, 0
      %p218 = por %p216, %p217
      %p219 = scmp.ne.s32.totalorder %s207, %s208
      %p220 = scmp.eq.s32.totalorder %s30, 1
      %p221 = por %p219, %p220
      %p223 = scmp.ne.s32.totalorder %s208, %s222
      %p224 = scmp.eq.s32.totalorder %s30, 0
      %p225 = por %p223, %p224
      %s227 = sadd.s32 %s226, 1
      %p230 = scmp.eq.s32.totalorder %s24, 1
      %p231 = scmp.ne.s32.totalorder %s226, %s228
      %p232 = scmp.eq.s32.totalorder %s24, 0
      %p233 = por %p231, %p232
      %p234 = scmp.ne.s32.totalorder %s226, %s228
      %p235 = scmp.eq.s32.totalorder %s29, 1
      %p236 = por %p234, %p235
      %p237 = scmp.ne.s32.totalorder %s228, %s229
      %p238 = scmp.eq.s32.totalorder %s29, 0
      %p239 = por %p237, %p238
      %p240 = scmp.ne.s32.totalorder %s228, %s229
      %p241 = scmp.eq.s32.totalorder %s30, 1
      %p242 = por %p240, %p241
      %p244 = scmp.ne.s32.totalorder %s229, %s243
      %p245 = scmp.eq.s32.totalorder %s30, 0
      %p246 = por %p244, %p245
      %s247 = ssub.s32 %s24, %s31
      %p248 = scmp.eq.s32.totalorder %s247, 0
      %s250 = sadd.s32 %s249, 1
      %s251 = scalar_select %p248, %s249, %s250
      %p254 = pneg %p248
      %p255 = scmp.eq.s32.totalorder %s24, 1
      %p256 = por %p254, %p255
      %p257 = scmp.ne.s32.totalorder %s249, %s252
      %p258 = scmp.eq.s32.totalorder %s24, 0
      %p259 = por %p257, %p258
      %p260 = scmp.ne.s32.totalorder %s249, %s252
      %p261 = scmp.eq.s32.totalorder %s29, 1
      %p262 = por %p260, %p261
      %p263 = scmp.ne.s32.totalorder %s252, %s253
      %p264 = scmp.eq.s32.totalorder %s29, 0
      %p265 = por %p263, %p264
      %p266 = scmp.ne.s32.totalorder %s252, %s253
      %p267 = scmp.eq.s32.totalorder %s30, 1
      %p268 = por %p266, %p267
      %p270 = scmp.ne.s32.totalorder %s253, %s269
      %p271 = scmp.eq.s32.totalorder %s30, 0
      %p272 = por %p270, %p271
      %p273 = scmp.le.s32.totalorder 1, %s24
      %p274 = scmp.lt.s32.totalorder %s24, 3
      %p275 = pnand %p273, %p274
      %p276 = pneg %p275
      // Predicated region
      $region9: #{_lambda_.1} parent=5 // pred_check
        _
      $region10: #{_lambda_.1} parent=5 // pred_check_branch
        %278 = sbr.rel (%p275) target = $region12
      $region11: #{_lambda_.1} parent=5 // pred_region
        %s279 = ssub.s32 %s24, 1
        // Predicated region
        $region13: #{_lambda_.1} parent=11 // pred_check
          %p280 = pneg %p71
        $region14: #{_lambda_.1} parent=11 // pred_check_branch
          %282 = sbr.rel (%p280) target = $region16
        $region15: #{_lambda_.1} parent=11 // pred_region
          _
        $region16: #{_lambda_.1} parent=11 // pred_fallthru
          _
        // Predicated region
        $region17: #{_lambda_.1} parent=11 // pred_check
          %p283 = pneg %p92
        $region18: #{_lambda_.1} parent=11 // pred_check_branch
          %285 = sbr.rel (%p283) target = $region20
        $region19: #{_lambda_.1} parent=11 // pred_region
          %s287 = ssub.s32 2048, 2048
          %288 = vsyncadd [#allocation13], %s287
          %s289 = sshll.u32 [#allocation12], 4
          %s290 = int_to_ptr.vmem [resolvable:$true] %s289
          %295 = dma.hbm_to_vmem [thread:$0]  %s2, 2048, %s290, [#allocation13], 256, 256, 16
        $region20: #{_lambda_.1} parent=11 // pred_fallthru
          _
        // Predicated region
        $region21: #{_lambda_.1} parent=11 // pred_check
          %p296 = pneg %p113
        $region22: #{_lambda_.1} parent=11 // pred_check_branch
          %298 = sbr.rel (%p296) target = $region24
        $region23: #{_lambda_.1} parent=11 // pred_region
          _
        $region24: #{_lambda_.1} parent=11 // pred_fallthru
          _
        // Predicated region
        $region25: #{_lambda_.1} parent=11 // pred_check
          %p299 = pneg %p134
        $region26: #{_lambda_.1} parent=11 // pred_check_branch
          %301 = sbr.rel (%p299) target = $region28
        $region27: #{_lambda_.1} parent=11 // pred_region
          _
        $region28: #{_lambda_.1} parent=11 // pred_fallthru
          _
        // Predicated region
        $region29: #{_lambda_.1} parent=11 // pred_check
          %p302 = pneg %p155
        $region30: #{_lambda_.1} parent=11 // pred_check_branch
          %304 = sbr.rel (%p302) target = $region32
        $region31: #{_lambda_.1} parent=11 // pred_region
          %s306 = ssub.s32 4096, 4096
          %307 = vsyncadd [#allocation13], %s306
          %s308 = sshll.u32 [#allocation14], 4
          %s309 = int_to_ptr.vmem [resolvable:$true] %s308
          %314 = dma.hbm_to_vmem [thread:$0]  %s5, 4096, %s309, [#allocation13], 256, 256, 16
        $region32: #{_lambda_.1} parent=11 // pred_fallthru
          _
        // Predicated region
        $region33: #{_lambda_.1} parent=11 // pred_check
          %p315 = pneg %p176
        $region34: #{_lambda_.1} parent=11 // pred_check_branch
          %317 = sbr.rel (%p315) target = $region36
        $region35: #{_lambda_.1} parent=11 // pred_region
          _
        $region36: #{_lambda_.1} parent=11 // pred_fallthru
          _
        // Predicated region
        $region37: #{_lambda_.1} parent=11 // pred_check
          %p318 = pneg %p197
        $region38: #{_lambda_.1} parent=11 // pred_check_branch
          %320 = sbr.rel (%p318) target = $region40
        $region39: #{_lambda_.1} parent=11 // pred_region
          %s322 = ssub.s32 256, 256
          %323 = vsyncadd [#allocation16], %s322
          %s324 = sshll.u32 [#allocation15], 4
          %s325 = int_to_ptr.vmem [resolvable:$true] %s324
          %330 = dma.hbm_to_vmem [thread:$0]  %s7, 256, %s325, [#allocation16], 128, 128, 8
        $region40: #{_lambda_.1} parent=11 // pred_fallthru
          _
        // Predicated region
        $region41: #{_lambda_.1} parent=11 // pred_check
          %p331 = pneg %p218
        $region42: #{_lambda_.1} parent=11 // pred_check_branch
          %333 = sbr.rel (%p331) target = $region44
        $region43: #{_lambda_.1} parent=11 // pred_region
          _
        $region44: #{_lambda_.1} parent=11 // pred_fallthru
          _
        // Predicated region
        $region45: #{_lambda_.1} parent=11 // pred_check
          %p334 = pneg %p239
        $region46: #{_lambda_.1} parent=11 // pred_check_branch
          %336 = sbr.rel (%p334) target = $region48
        $region47: #{_lambda_.1} parent=11 // pred_region
          %s338 = ssub.s32 2048, 2048
          %339 = vsyncadd [#allocation16], %s338
          %s340 = sshll.u32 [#allocation17], 4
          %s341 = int_to_ptr.vmem [resolvable:$true] %s340
          %346 = dma.hbm_to_vmem [thread:$0]  %s9, 2048, %s341, [#allocation16], 128, 128, 8
        $region48: #{_lambda_.1} parent=11 // pred_fallthru
          _
      $region12: #{_lambda_.1} parent=5 // pred_fallthru
        _
      %p347 = scmp.lt.s32.totalorder %s24, 2
      // Predicated region
      $region49: #{_lambda_.1} parent=5 // pred_check
        %p348 = pneg %p347
      $region50: #{_lambda_.1} parent=5 // pred_check_branch
        %350 = sbr.rel (%p348) target = $region52
      $region51: #{_lambda_.1} parent=5 // pred_region
        // Predicated region
        $region53: #{_lambda_.1} parent=51 // pred_check
          %p351 = pneg %p44
        $region54: #{_lambda_.1} parent=51 // pred_check_branch
          %353 = sbr.rel (%p351) target = $region56
        $region55: #{_lambda_.1} parent=51 // pred_region
          %s354 = sand.u32 %s34, 1
          %s355 = scalar_lea.sflag [#allocation10], %s354
          %s356 = sand.u32 %s34, 1
          %s357 = smul.addr %s356, 8
          %s358 = scalar_lea.vmem [#allocation9], %s357
          %s360 = ssub.s32 128, 128
          %361 = vsyncadd %s355, %s360
          %s362 = smul.addr %s24, 128
          %s363 = scalar_lea.hbm %s0, %s362
          %s365 = sshll.u32 %s358, 4
          %s366 = int_to_ptr.vmem [resolvable:$true] %s365
          %368 = dma.hbm_to_vmem [thread:$0]  %s363, 128, %s366, %s355
        $region56: #{_lambda_.1} parent=51 // pred_fallthru
          _
      $region52: #{_lambda_.1} parent=5 // pred_fallthru
        _
      %p369 = scmp.le.s32.totalorder 1, %s24
      %p370 = scmp.lt.s32.totalorder %s24, 3
      %p371 = pnand %p369, %p370
      %p372 = pneg %p371
      // Predicated region
      $region57: #{_lambda_.1} parent=5 // pred_check
        _
      $region58: #{_lambda_.1} parent=5 // pred_check_branch
        %374 = sbr.rel (%p371) target = $region60
      $region59: #{_lambda_.1} parent=5 // pred_region
        %s375 = ssub.s32 %s24, 1
        %s376 = sand.u32 %s37, 1
        %s377 = scalar_lea.sflag [#allocation10], %s376
        %s378 = sand.u32 %s37, 1
        %s379 = smul.addr %s378, 8
        %s380 = scalar_lea.vmem [#allocation9], %s379
        // Predicated region
        $region61: #{_lambda_.1} parent=59 // pred_check
          %p381 = pneg %p50
        $region62: #{_lambda_.1} parent=59 // pred_check_branch
          %383 = sbr.rel (%p381) target = $region64
        $region63: #{_lambda_.1} parent=59 // pred_region
          %384 = dma.done %s377, 128
        $region64: #{_lambda_.1} parent=59 // pred_fallthru
          _
        // Predicated region
        $region65: #{_lambda_.1} parent=59 // pred_check
          %p385 = pneg %p92
        $region66: #{_lambda_.1} parent=59 // pred_check_branch
          %387 = sbr.rel (%p385) target = $region68
        $region67: #{_lambda_.1} parent=59 // pred_region
          %388 = dma.done [#allocation13], 2048
        $region68: #{_lambda_.1} parent=59 // pred_fallthru
          _
        // Predicated region
        $region69: #{_lambda_.1} parent=59 // pred_check
          %p389 = pneg %p155
        $region70: #{_lambda_.1} parent=59 // pred_check_branch
          %391 = sbr.rel (%p389) target = $region72
        $region71: #{_lambda_.1} parent=59 // pred_region
          %392 = dma.done [#allocation13], 4096
        $region72: #{_lambda_.1} parent=59 // pred_fallthru
          _
        // Predicated region
        $region73: #{_lambda_.1} parent=59 // pred_check
          %p393 = pneg %p197
        $region74: #{_lambda_.1} parent=59 // pred_check_branch
          %395 = sbr.rel (%p393) target = $region76
        $region75: #{_lambda_.1} parent=59 // pred_region
          %396 = dma.done [#allocation16], 256
        $region76: #{_lambda_.1} parent=59 // pred_fallthru
          _
        // Predicated region
        $region77: #{_lambda_.1} parent=59 // pred_check
          %p397 = pneg %p239
        $region78: #{_lambda_.1} parent=59 // pred_check_branch
          %399 = sbr.rel (%p397) target = $region80
        $region79: #{_lambda_.1} parent=59 // pred_region
          %400 = dma.done [#allocation16], 2048
        $region80: #{_lambda_.1} parent=59 // pred_fallthru
          _
        %s401 = sand.u32 %s37, 1
        %s402 = scalar_lea.sflag [#allocation10], %s401
        %s403 = sand.u32 %s37, 1
        %s404 = smul.addr %s403, 8
        %s405 = scalar_lea.vmem [#allocation9], %s404
        %p406 = pneg %p50
        %p407 = pneg %p47
        %p408 = pneg %p71
        %p409 = pneg %p68
        %p410 = pneg %p92
        %p411 = pneg %p89
        %p412 = pneg %p113
        %p413 = pneg %p110
        %p414 = pneg %p134
        %p415 = pneg %p131
        %p416 = pneg %p155
        %p417 = pneg %p152
        %p418 = pneg %p176
        %p419 = pneg %p173
        %p420 = pneg %p197
        %p421 = pneg %p194
        %p422 = pneg %p218
        %p423 = pneg %p215
        %p424 = pneg %p239
        %p425 = pneg %p236
        %p426 = pneg %p265
        %p427 = pneg %p262
        %s428 = sand.u32 %s252, 1
        %s429 = scalar_lea.sflag [#allocation11], %s428
        %s430 = sand.u32 %s252, 1
        %s431 = smul.addr %s430, 8
        %s432 = scalar_lea.vmem [#allocation18], %s431
        %v433 = vld [vmem:[%s380] sm:$0xff]
        %v434 = vmul.f32 %v433, %v433
        %vm435 = vcmask 523264
        %v436 = vsel %vm435, %v434, 0.0
        %437 = vadd.xlane.f32.xlu0 %v436
        %v438 = vpop.xlane.xlu0 %437
        %v439 = vrcp.pop 64.0
        %v440 = vmul.f32 %v438, %v439
        %v441 = vadd.f32 %v440, 1e-05
        %v442 = vrsqrt.pop %v441
        %v443 = vmul.f32 %v433, %v442
        %v444 = vld [vmem:[%s1] sm:$0x1]
        %v446 = vlaneseq
        %v447 = vshrl.u32 %v446, 7
        %v448 = vsub.s32 0, %v447
        %v449 = vrot.slane %v444, %v448
        %v451 = vmul.f32 %v443, %v449
        %v452 = vld [vmem:[#allocation12] sm:$0xff]
        %v453 = vld [vmem:[#allocation12 + $0x8] sm:$0xff]
        %v454 = vld [vmem:[#allocation12 + $0x10] sm:$0xff]
        %v455 = vld [vmem:[#allocation12 + $0x18] sm:$0xff]
        %v456 = vld [vmem:[#allocation12 + $0x20] sm:$0xff]
        %v457 = vld [vmem:[#allocation12 + $0x28] sm:$0xff]
        %v458 = vld [vmem:[#allocation12 + $0x30] sm:$0xff]
        %v459 = vld [vmem:[#allocation12 + $0x38] sm:$0xff]
        %v460 = vld [vmem:[#allocation12 + $0x40] sm:$0xff]
        %v461 = vld [vmem:[#allocation12 + $0x48] sm:$0xff]
        %v462 = vld [vmem:[#allocation12 + $0x50] sm:$0xff]
        %v463 = vld [vmem:[#allocation12 + $0x58] sm:$0xff]
        %v464 = vld [vmem:[#allocation12 + $0x60] sm:$0xff]
        %v465 = vld [vmem:[#allocation12 + $0x68] sm:$0xff]
        %v466 = vld [vmem:[#allocation12 + $0x70] sm:$0xff]
        %v467 = vld [vmem:[#allocation12 + $0x78] sm:$0xff]
        %v469 = vsel %vm435, %v451, 0
        %471 = vmatprep.subr.mxu0 %v453
        %472 = vmatpush1.msra.mxu0 %v452
        %473 = vmatprep.subr.mxu0 %v455
        %474 = vmatpush1.msra.mxu0 %v454
        %475 = vmatprep.subr.mxu0 %v457
        %476 = vmatpush1.msra.mxu0 %v456
        %477 = vmatprep.subr.mxu0 %v459
        %478 = vmatpush1.msra.mxu0 %v458
        %479 = vmatprep.subr.mxu0 %v461
        %480 = vmatpush1.msra.mxu0 %v460
        %481 = vmatprep.subr.mxu0 %v463
        %482 = vmatpush1.msra.mxu0 %v462
        %483 = vmatprep.subr.mxu0 %v465
        %484 = vmatpush1.msra.mxu0 %v464
        %485 = vmatprep.subr.mxu0 %v467
        %486 = vmatpush1.msra.mxu0 %v466
        %487 = vmatprep.subr.mxu0 0.0
        %488 = vmatpush1.msra.mxu0 0.0
        %489 = vmatprep.subr.mxu0 0.0
        %490 = vmatpush1.msra.mxu0 0.0
        %491 = vmatprep.subr.mxu0 0.0
        %492 = vmatpush1.msra.mxu0 0.0
        %493 = vmatprep.subr.mxu0 0.0
        %494 = vmatpush1.msra.mxu0 0.0
        %495 = vmatprep.subr.mxu0 0.0
        %496 = vmatpush1.msra.mxu0 0.0
        %497 = vmatprep.subr.mxu0 0.0
        %498 = vmatpush1.msra.mxu0 0.0
        %499 = vmatprep.subr.mxu0 0.0
        %500 = vmatpush1.msra.mxu0 0.0
        %501 = vmatprep.subr.mxu0 0.0
        %502 = vmatpush1.msra.mxu0 0.0
        %503 = vmatprep.subr.mxu0 0.0
        %504 = vmatpush1.msra.mxu0 0.0
        %505 = vmatprep.subr.mxu0 0.0
        %506 = vmatpush1.msra.mxu0 0.0
        %507 = vmatprep.subr.mxu0 0.0
        %508 = vmatpush1.msra.mxu0 0.0
        %509 = vmatprep.subr.mxu0 0.0
        %510 = vmatpush1.msra.mxu0 0.0
        %511 = vmatprep.subr.mxu0 0.0
        %512 = vmatpush1.msra.mxu0 0.0
        %513 = vmatprep.subr.mxu0 0.0
        %514 = vmatpush1.msra.mxu0 0.0
        %515 = vmatprep.subr.mxu0 0.0
        %516 = vmatpush1.msra.mxu0 0.0
        %517 = vmatprep.subr.mxu0 0.0
        %518 = vmatpush1.msra.mxu0 0.0
        %519 = vmatprep.subr.mxu0 0.0
        %520 = vmatpush1.msra.mxu0 0.0
        %521 = vmatprep.subr.mxu0 0.0
        %522 = vmatpush1.msra.mxu0 0.0
        %523 = vmatprep.subr.mxu0 0.0
        %524 = vmatpush1.msra.mxu0 0.0
        %525 = vmatprep.subr.mxu0 0.0
        %526 = vmatpush1.msra.mxu0 0.0
        %527 = vmatprep.subr.mxu0 0.0
        %528 = vmatpush1.msra.mxu0 0.0
        %529 = vmatprep.subr.mxu0 0.0
        %530 = vmatpush1.msra.mxu0 0.0
        %531 = vmatprep.subr.mxu0 0.0
        %532 = vmatpush1.msra.mxu0 0.0
        %533 = vmatprep.subr.mxu0 0.0
        %534 = vmatpush1.msra.mxu0 0.0
        %535 = vmatprep.mubr.f32.mxu0 0.0
        %536 = vmatmul.mubr.f32.gmra.mrb[0].mxu0 %v469
        %v537 = vpop.f32.mrb[0].mxu0
        %v538 = vadd.f32 0.0, %v537
        %v539 = vpop.f32.mrb[0].mxu0
        %v540 = vadd.f32 0.0, %v539
        %541 = vdwg.mxu0
        %542 = vst [vmem:[#allocation2] sm:$0xff] %v540
        %v543 = vlaneseq
        %v544 = vshrl.u32 %v543, 7
        %v545 = vld [vmem:[%s3 + $0x3] sm:$0x1]
        %v546 = vlaneseq
        %v547 = vshrl.u32 %v546, 7
        %v548 = vsub.s32 0, %v547
        %v549 = vrot.slane %v545, %v548
        %v550 = vmul.f32 %v538, %v549
        %v551 = vld [vmem:[%s4] sm:$0x1]
        %v553 = vlaneseq
        %v554 = vshrl.u32 %v553, 7
        %v555 = vsub.s32 0, %v554
        %v556 = vrot.slane %v551, %v555
        %v558 = vadd.f32 %v550, %v556
        %v559 = vld [vmem:[%s3 + $0x2] sm:$0x1]
        %vm560 = vcmp.ge.s32.totalorder %v544, 1
        %v561 = vrot.slane %v538, 7
        %v562 = vsel %vm560, 1, 0
        %vm563 = vcmp.eq.s32.totalorder %v562, 1
        %v564 = vsel %vm563, %v561, 0.0
        %v565 = vlaneseq
        %v566 = vshrl.u32 %v565, 7
        %v567 = vsub.s32 0, %v566
        %v568 = vrot.slane %v559, %v567
        %v569 = vmul.f32 %v564, %v568
        %v570 = vadd.f32 %v558, %v569
        %v571 = vld [vmem:[%s3 + $0x1] sm:$0x1]
        %vm572 = vcmp.ge.s32.totalorder %v544, 2
        %v573 = vrot.slane %v538, 6
        %v574 = vsel %vm572, 1, 0
        %vm575 = vcmp.eq.s32.totalorder %v574, 1
        %v576 = vsel %vm575, %v573, 0.0
        %v577 = vlaneseq
        %v578 = vshrl.u32 %v577, 7
        %v579 = vsub.s32 0, %v578
        %v580 = vrot.slane %v571, %v579
        %v581 = vmul.f32 %v576, %v580
        %v582 = vadd.f32 %v570, %v581
        %v583 = vld [vmem:[%s3] sm:$0x1]
        %vm584 = vcmp.ge.s32.totalorder %v544, 3
        %v585 = vrot.slane %v538, 5
        %v586 = vsel %vm584, 1, 0
        %vm587 = vcmp.eq.s32.totalorder %v586, 1
        %v588 = vsel %vm587, %v585, 0.0
        %v589 = vlaneseq
        %v590 = vshrl.u32 %v589, 7
        %v591 = vsub.s32 0, %v590
        %v592 = vrot.slane %v583, %v591
        %v593 = vmul.f32 %v588, %v592
        %v594 = vadd.f32 %v582, %v593
        %v595 = vxor.u32 %v594, 2147483648
        %v596 = vmul.f32 %v595, 1.442695
        %v597 = vpow.pop %v596
        %v598 = vadd.f32 %v597, 1.0
        %v599 = vrcp.pop %v598
        %v600 = vmul.f32 1.0, %v599
        %v601 = vmul.f32 %v594, %v600
        %v602 = vld [vmem:[#allocation14] sm:$0xff]
        %v603 = vld [vmem:[#allocation14 + $0x8] sm:$0xff]
        %v604 = vld [vmem:[#allocation14 + $0x10] sm:$0xff]
        %v605 = vld [vmem:[#allocation14 + $0x18] sm:$0xff]
        %v606 = vld [vmem:[#allocation14 + $0x20] sm:$0xff]
        %v607 = vld [vmem:[#allocation14 + $0x28] sm:$0xff]
        %v608 = vld [vmem:[#allocation14 + $0x30] sm:$0xff]
        %v609 = vld [vmem:[#allocation14 + $0x38] sm:$0xff]
        %v610 = vld [vmem:[#allocation14 + $0x40] sm:$0xff]
        %v611 = vld [vmem:[#allocation14 + $0x48] sm:$0xff]
        %v612 = vld [vmem:[#allocation14 + $0x50] sm:$0xff]
        %v613 = vld [vmem:[#allocation14 + $0x58] sm:$0xff]
        %v614 = vld [vmem:[#allocation14 + $0x60] sm:$0xff]
        %v615 = vld [vmem:[#allocation14 + $0x68] sm:$0xff]
        %v616 = vld [vmem:[#allocation14 + $0x70] sm:$0xff]
        %v617 = vld [vmem:[#allocation14 + $0x78] sm:$0xff]
        %v618 = vld [vmem:[#allocation14 + $0x80] sm:$0xff]
        %v619 = vld [vmem:[#allocation14 + $0x88] sm:$0xff]
        %v620 = vld [vmem:[#allocation14 + $0x90] sm:$0xff]
        %v621 = vld [vmem:[#allocation14 + $0x98] sm:$0xff]
        %v622 = vld [vmem:[#allocation14 + $0xa0] sm:$0xff]
        %v623 = vld [vmem:[#allocation14 + $0xa8] sm:$0xff]
        %v624 = vld [vmem:[#allocation14 + $0xb0] sm:$0xff]
        %v625 = vld [vmem:[#allocation14 + $0xb8] sm:$0xff]
        %v626 = vld [vmem:[#allocation14 + $0xc0] sm:$0xff]
        %v627 = vld [vmem:[#allocation14 + $0xc8] sm:$0xff]
        %v628 = vld [vmem:[#allocation14 + $0xd0] sm:$0xff]
        %v629 = vld [vmem:[#allocation14 + $0xd8] sm:$0xff]
        %v630 = vld [vmem:[#allocation14 + $0xe0] sm:$0xff]
        %v631 = vld [vmem:[#allocation14 + $0xe8] sm:$0xff]
        %v632 = vld [vmem:[#allocation14 + $0xf0] sm:$0xff]
        %v633 = vld [vmem:[#allocation14 + $0xf8] sm:$0xff]
        %634 = vmatprep.subr.mxu0 %v603
        %635 = vmatpush1.msra.mxu0 %v602
        %636 = vmatprep.subr.mxu0 %v605
        %637 = vmatpush1.msra.mxu0 %v604
        %638 = vmatprep.subr.mxu0 %v607
        %639 = vmatpush1.msra.mxu0 %v606
        %640 = vmatprep.subr.mxu0 %v609
        %641 = vmatpush1.msra.mxu0 %v608
        %642 = vmatprep.subr.mxu0 %v611
        %643 = vmatpush1.msra.mxu0 %v610
        %644 = vmatprep.subr.mxu0 %v613
        %645 = vmatpush1.msra.mxu0 %v612
        %646 = vmatprep.subr.mxu0 %v615
        %647 = vmatpush1.msra.mxu0 %v614
        %648 = vmatprep.subr.mxu0 %v617
        %649 = vmatpush1.msra.mxu0 %v616
        %650 = vmatprep.subr.mxu0 %v619
        %651 = vmatpush1.msra.mxu0 %v618
        %652 = vmatprep.subr.mxu0 %v621
        %653 = vmatpush1.msra.mxu0 %v620
        %654 = vmatprep.subr.mxu0 %v623
        %655 = vmatpush1.msra.mxu0 %v622
        %656 = vmatprep.subr.mxu0 %v625
        %657 = vmatpush1.msra.mxu0 %v624
        %658 = vmatprep.subr.mxu0 %v627
        %659 = vmatpush1.msra.mxu0 %v626
        %660 = vmatprep.subr.mxu0 %v629
        %661 = vmatpush1.msra.mxu0 %v628
        %662 = vmatprep.subr.mxu0 %v631
        %663 = vmatpush1.msra.mxu0 %v630
        %664 = vmatprep.subr.mxu0 %v633
        %665 = vmatpush1.msra.mxu0 %v632
        %666 = vmatprep.subr.mxu0 0.0
        %667 = vmatpush1.msra.mxu0 0.0
        %668 = vmatprep.subr.mxu0 0.0
        %669 = vmatpush1.msra.mxu0 0.0
        %670 = vmatprep.subr.mxu0 0.0
        %671 = vmatpush1.msra.mxu0 0.0
        %672 = vmatprep.subr.mxu0 0.0
        %673 = vmatpush1.msra.mxu0 0.0
        %674 = vmatprep.subr.mxu0 0.0
        %675 = vmatpush1.msra.mxu0 0.0
        %676 = vmatprep.subr.mxu0 0.0
        %677 = vmatpush1.msra.mxu0 0.0
        %678 = vmatprep.subr.mxu0 0.0
        %679 = vmatpush1.msra.mxu0 0.0
        %680 = vmatprep.subr.mxu0 0.0
        %681 = vmatpush1.msra.mxu0 0.0
        %682 = vmatprep.subr.mxu0 0.0
        %683 = vmatpush1.msra.mxu0 0.0
        %684 = vmatprep.subr.mxu0 0.0
        %685 = vmatpush1.msra.mxu0 0.0
        %686 = vmatprep.subr.mxu0 0.0
        %687 = vmatpush1.msra.mxu0 0.0
        %688 = vmatprep.subr.mxu0 0.0
        %689 = vmatpush1.msra.mxu0 0.0
        %690 = vmatprep.subr.mxu0 0.0
        %691 = vmatpush1.msra.mxu0 0.0
        %692 = vmatprep.subr.mxu0 0.0
        %693 = vmatpush1.msra.mxu0 0.0
        %694 = vmatprep.subr.mxu0 0.0
        %695 = vmatpush1.msra.mxu0 0.0
        %696 = vmatprep.subr.mxu0 0.0
        %697 = vmatpush1.msra.mxu0 0.0
        %698 = vmatprep.mubr.f32.mxu0 0.0
        %699 = vmatmul.mubr.f32.gmra.mrb[0].mxu0 %v601
        %v700 = vpop.f32.mrb[0].mxu0
        %v701 = vadd.f32 0.0, %v700
        %v702 = vpop.f32.mrb[0].mxu0
        %v703 = vadd.f32 0.0, %v702
        %704 = vdwg.mxu0
        %v705 = vld [vmem:[%s6] sm:$0x1]
        %v707 = vlaneseq
        %v708 = vshrl.u32 %v707, 7
        %v709 = vsub.s32 0, %v708
        %v710 = vrot.slane %v705, %v709
        %v712 = vadd.f32 %v701, %v710
        %v713 = vmax.f32 %v712, 0.0
        %vm714 = vcmp.ne.f32.partialorder %v712, %v712
        %v715 = vadd.f32 %v712, 0.0
        %v716 = vand.u32 2147483647, %v712
        %v717 = vsub.f32 0.0, %v716
        %v718 = vmul.f32 %v717, 1.442695
        %v719 = vpow.pop %v718
        %v720 = vadd.f32 %v719, 1.0
        %v721 = vlog2.pop %v720
        %v722 = vmul.f32 %v721, 0.6931472
        %v723 = vmul.f32 -0.5, %v719
        %v724 = vadd.f32 %v723, 1.0
        %v725 = vmul.f32 %v724, %v719
        %v726 = vand.u32 2147483647, %v719
        %vm727 = vcmp.lt.f32.partialorder %v726, 0.0004427343
        %v728 = vsel %vm727, %v725, %v722
        %v729 = vadd.f32 %v713, %v728
        %v730 = vsel %vm714, %v715, %v729
        %731 = vst [vmem:[#allocation3] sm:$0xff] %v730
        %v732 = vmul.f32 %v730, %v601
        %733 = vst [vmem:[#allocation4] sm:$0xff] %v732
        %vm734 = vcmask 261120
        %735 = vst.msk [vmem:[#allocation5] sm:$0xff] %vm734, %v703
        %v736 = vld [vmem:[%s8] sm:$0x1]
        %v738 = vlaneseq
        %v739 = vshrl.u32 %v738, 7
        %v740 = vsub.s32 0, %v739
        %v741 = vrot.slane %v736, %v740
        %v743 = vmul.f32 %v601, %v741
        %744 = vst [vmem:[#allocation6] sm:$0xff] %v743
        %v745 = vld [vmem:[#allocation15] sm:$0xff]
        %v746 = vld [vmem:[#allocation15 + $0x8] sm:$0xff]
        %v747 = vld [vmem:[#allocation3] sm:$0xff]
        %v748 = vld [vmem:[#allocation4] sm:$0xff]
        %v749 = vld [vmem:[#allocation5] sm:$0xff]
        %750 = vxpose.xlu0.b32.start [1/16] %v749, 128
        %751 = vxpose.xlu0.b32.cont [2/16] 0.0, 128
        %752 = vxpose.xlu0.b32.cont [3/16] 0.0, 128
        %753 = vxpose.xlu0.b32.cont [4/16] 0.0, 128
        %754 = vxpose.xlu0.b32.cont [5/16] 0.0, 128
        %755 = vxpose.xlu0.b32.cont [6/16] 0.0, 128
        %756 = vxpose.xlu0.b32.cont [7/16] 0.0, 128
        %757 = vxpose.xlu0.b32.cont [8/16] 0.0, 128
        %758 = vxpose.xlu0.b32.cont [9/16] 0.0, 128
        %759 = vxpose.xlu0.b32.cont [10/16] 0.0, 128
        %760 = vxpose.xlu0.b32.cont [11/16] 0.0, 128
        %761 = vxpose.xlu0.b32.cont [12/16] 0.0, 128
        %762 = vxpose.xlu0.b32.cont [13/16] 0.0, 128
        %763 = vxpose.xlu0.b32.cont [14/16] 0.0, 128
        %764 = vxpose.xlu0.b32.cont [15/16] 0.0, 128
        %765 = vxpose.xlu0.b32.end [16/16] 0.0, 128
        %v766 = vpop.trf.xlu0
        %v767 = vpop.trf.xlu0
        %v768 = vpop.trf.xlu0
        %v769 = vpop.trf.xlu0
        %v770 = vpop.trf.xlu0
        %v771 = vpop.trf.xlu0
        %v772 = vpop.trf.xlu0
        %v773 = vpop.trf.xlu0
        %v774 = vpop.trf.xlu0
        %v775 = vpop.trf.xlu0
        %v776 = vpop.trf.xlu0
        %v777 = vpop.trf.xlu0
        %v778 = vpop.trf.xlu0
        %v779 = vpop.trf.xlu0
        %v780 = vpop.trf.xlu0
        %v781 = vpop.trf.xlu0
        %783 = vrot.lane.b32.xlu0 %v749, 112
        %v784 = vpop.permute.xlu0 %783
        %786 = vxpose.xlu0.b32.start [1/16] %v784, 128
        %787 = vxpose.xlu0.b32.cont [2/16] 0.0, 128
        %788 = vxpose.xlu0.b32.cont [3/16] 0.0, 128
        %789 = vxpose.xlu0.b32.cont [4/16] 0.0, 128
        %790 = vxpose.xlu0.b32.cont [5/16] 0.0, 128
        %791 = vxpose.xlu0.b32.cont [6/16] 0.0, 128
        %792 = vxpose.xlu0.b32.cont [7/16] 0.0, 128
        %793 = vxpose.xlu0.b32.cont [8/16] 0.0, 128
        %794 = vxpose.xlu0.b32.cont [9/16] 0.0, 128
        %795 = vxpose.xlu0.b32.cont [10/16] 0.0, 128
        %796 = vxpose.xlu0.b32.cont [11/16] 0.0, 128
        %797 = vxpose.xlu0.b32.cont [12/16] 0.0, 128
        %798 = vxpose.xlu0.b32.cont [13/16] 0.0, 128
        %799 = vxpose.xlu0.b32.cont [14/16] 0.0, 128
        %800 = vxpose.xlu0.b32.cont [15/16] 0.0, 128
        %801 = vxpose.xlu0.b32.end [16/16] 0.0, 128
        %v802 = vpop.trf.xlu0
        %v803 = vpop.trf.xlu0
        %v804 = vpop.trf.xlu0
        %v805 = vpop.trf.xlu0
        %v806 = vpop.trf.xlu0
        %v807 = vpop.trf.xlu0
        %v808 = vpop.trf.xlu0
        %v809 = vpop.trf.xlu0
        %v810 = vpop.trf.xlu0
        %v811 = vpop.trf.xlu0
        %v812 = vpop.trf.xlu0
        %v813 = vpop.trf.xlu0
        %v814 = vpop.trf.xlu0
        %v815 = vpop.trf.xlu0
        %v816 = vpop.trf.xlu0
        %v817 = vpop.trf.xlu0
        %v818 = vlaneseq
        %v819 = vshrl.u32 %v818, 7
        %v820 = vsub.s32 0, %v819
        %v821 = vrot.slane %v747, %v820
        %v822 = vmul.f32 %v821, %v745
        %v823 = vmul.f32 %v821, %v746
        %v824 = vmul.f32 %v822, 1.442695
        %v825 = vpow.pop %v824
        %v826 = vmul.f32 %v823, 1.442695
        %v827 = vpow.pop %v826
        %828 = vst [vmem:[#allocation7] sm:$0xff] %v825
        %829 = vst [vmem:[#allocation7 + $0x8] sm:$0xff] %v827
        %v830 = vlaneseq
        %v831 = vshrl.u32 %v830, 7
        %v832 = vsub.s32 0, %v831
        %v833 = vrot.slane %v748, %v832
        %835 = vset.pattern.permute.xlu0 0
        %836 = vperm.xlu0 %835, %v766
        %v837 = vpop.permute.xlu0 %836
        %840 = vset.pattern.permute.xlu0 0
        %841 = vperm.xlu0 %840, %v767
        %v842 = vpop.permute.xlu0 %841
        %v844 = vmul.f32 %v833, %v837
        %v845 = vmul.f32 %v833, %v842
        %846 = vst [vmem:[#allocation8] sm:$0xff] %v844
        %847 = vst [vmem:[#allocation8 + $0x8] sm:$0xff] %v845
        %v848 = vlaneseq
        %v849 = vshrl.u32 %v848, 7
        %v850 = vsub.s32 1, %v849
        %v851 = vrot.slane %v747, %v850
        %v852 = vmul.f32 %v851, %v745
        %v853 = vmul.f32 %v851, %v746
        %v854 = vmul.f32 %v852, 1.442695
        %v855 = vpow.pop %v854
        %v856 = vmul.f32 %v853, 1.442695
        %v857 = vpow.pop %v856
        %858 = vst [vmem:[#allocation7 + $0x10] sm:$0xff] %v855
        %859 = vst [vmem:[#allocation7 + $0x18] sm:$0xff] %v857
        %v860 = vlaneseq
        %v861 = vshrl.u32 %v860, 7
        %v862 = vsub.s32 1, %v861
        %v863 = vrot.slane %v748, %v862
        %864 = vset.pattern.permute.xlu0 1
        %865 = vperm.xlu0 %864, %v766
        %v866 = vpop.permute.xlu0 %865
        %868 = vset.pattern.permute.xlu0 1
        %869 = vperm.xlu0 %868, %v767
        %v870 = vpop.permute.xlu0 %869
        %v872 = vmul.f32 %v863, %v866
        %v873 = vmul.f32 %v863, %v870
        %874 = vst [vmem:[#allocation8 + $0x10] sm:$0xff] %v872
        %875 = vst [vmem:[#allocation8 + $0x18] sm:$0xff] %v873
        %v876 = vlaneseq
        %v877 = vshrl.u32 %v876, 7
        %v878 = vsub.s32 2, %v877
        %v879 = vrot.slane %v747, %v878
        %v880 = vmul.f32 %v879, %v745
        %v881 = vmul.f32 %v879, %v746
        %v882 = vmul.f32 %v880, 1.442695
        %v883 = vpow.pop %v882
        %v884 = vmul.f32 %v881, 1.442695
        %v885 = vpow.pop %v884
        %886 = vst [vmem:[#allocation7 + $0x20] sm:$0xff] %v883
        %887 = vst [vmem:[#allocation7 + $0x28] sm:$0xff] %v885
        %v888 = vlaneseq
        %v889 = vshrl.u32 %v888, 7
        %v890 = vsub.s32 2, %v889
        %v891 = vrot.slane %v748, %v890
        %892 = vset.pattern.permute.xlu0 2
        %893 = vperm.xlu0 %892, %v766
        %v894 = vpop.permute.xlu0 %893
        %896 = vset.pattern.permute.xlu0 2
        %897 = vperm.xlu0 %896, %v767
        %v898 = vpop.permute.xlu0 %897
        %v900 = vmul.f32 %v891, %v894
        %v901 = vmul.f32 %v891, %v898
        %902 = vst [vmem:[#allocation8 + $0x20] sm:$0xff] %v900
        %903 = vst [vmem:[#allocation8 + $0x28] sm:$0xff] %v901
        %v904 = vlaneseq
        %v905 = vshrl.u32 %v904, 7
        %v906 = vsub.s32 3, %v905
        %v907 = vrot.slane %v747, %v906
        %v908 = vmul.f32 %v907, %v745
        %v909 = vmul.f32 %v907, %v746
        %v910 = vmul.f32 %v908, 1.442695
        %v911 = vpow.pop %v910
        %v912 = vmul.f32 %v909, 1.442695
        %v913 = vpow.pop %v912
        %914 = vst [vmem:[#allocation7 + $0x30] sm:$0xff] %v911
        %915 = vst [vmem:[#allocation7 + $0x38] sm:$0xff] %v913
        %v916 = vlaneseq
        %v917 = vshrl.u32 %v916, 7
        %v918 = vsub.s32 3, %v917
        %v919 = vrot.slane %v748, %v918
        %920 = vset.pattern.permute.xlu0 3
        %921 = vperm.xlu0 %920, %v766
        %v922 = vpop.permute.xlu0 %921
        %924 = vset.pattern.permute.xlu0 3
        %925 = vperm.xlu0 %924, %v767
        %v926 = vpop.permute.xlu0 %925
        %v928 = vmul.f32 %v919, %v922
        %v929 = vmul.f32 %v919, %v926
        %930 = vst [vmem:[#allocation8 + $0x30] sm:$0xff] %v928
        %931 = vst [vmem:[#allocation8 + $0x38] sm:$0xff] %v929
        %v932 = vlaneseq
        %v933 = vshrl.u32 %v932, 7
        %v934 = vsub.s32 4, %v933
        %v935 = vrot.slane %v747, %v934
        %v936 = vmul.f32 %v935, %v745
        %v937 = vmul.f32 %v935, %v746
        %v938 = vmul.f32 %v936, 1.442695
        %v939 = vpow.pop %v938
        %v940 = vmul.f32 %v937, 1.442695
        %v941 = vpow.pop %v940
        %942 = vst [vmem:[#allocation7 + $0x40] sm:$0xff] %v939
        %943 = vst [vmem:[#allocation7 + $0x48] sm:$0xff] %v941
        %v944 = vlaneseq
        %v945 = vshrl.u32 %v944, 7
        %v946 = vsub.s32 4, %v945
        %v947 = vrot.slane %v748, %v946
        %948 = vset.pattern.permute.xlu0 4
        %949 = vperm.xlu0 %948, %v766
        %v950 = vpop.permute.xlu0 %949
        %952 = vset.pattern.permute.xlu0 4
        %953 = vperm.xlu0 %952, %v767
        %v954 = vpop.permute.xlu0 %953
        %v956 = vmul.f32 %v947, %v950
        %v957 = vmul.f32 %v947, %v954
        %958 = vst [vmem:[#allocation8 + $0x40] sm:$0xff] %v956
        %959 = vst [vmem:[#allocation8 + $0x48] sm:$0xff] %v957
        %v960 = vlaneseq
        %v961 = vshrl.u32 %v960, 7
        %v962 = vsub.s32 5, %v961
        %v963 = vrot.slane %v747, %v962
        %v964 = vmul.f32 %v963, %v745
        %v965 = vmul.f32 %v963, %v746
        %v966 = vmul.f32 %v964, 1.442695
        %v967 = vpow.pop %v966
        %v968 = vmul.f32 %v965, 1.442695
        %v969 = vpow.pop %v968
        %970 = vst [vmem:[#allocation7 + $0x50] sm:$0xff] %v967
        %971 = vst [vmem:[#allocation7 + $0x58] sm:$0xff] %v969
        %v972 = vlaneseq
        %v973 = vshrl.u32 %v972, 7
        %v974 = vsub.s32 5, %v973
        %v975 = vrot.slane %v748, %v974
        %976 = vset.pattern.permute.xlu0 5
        %977 = vperm.xlu0 %976, %v766
        %v978 = vpop.permute.xlu0 %977
        %980 = vset.pattern.permute.xlu0 5
        %981 = vperm.xlu0 %980, %v767
        %v982 = vpop.permute.xlu0 %981
        %v984 = vmul.f32 %v975, %v978
        %v985 = vmul.f32 %v975, %v982
        %986 = vst [vmem:[#allocation8 + $0x50] sm:$0xff] %v984
        %987 = vst [vmem:[#allocation8 + $0x58] sm:$0xff] %v985
        %v988 = vlaneseq
        %v989 = vshrl.u32 %v988, 7
        %v990 = vsub.s32 6, %v989
        %v991 = vrot.slane %v747, %v990
        %v992 = vmul.f32 %v991, %v745
        %v993 = vmul.f32 %v991, %v746
        %v994 = vmul.f32 %v992, 1.442695
        %v995 = vpow.pop %v994
        %v996 = vmul.f32 %v993, 1.442695
        %v997 = vpow.pop %v996
        %998 = vst [vmem:[#allocation7 + $0x60] sm:$0xff] %v995
        %999 = vst [vmem:[#allocation7 + $0x68] sm:$0xff] %v997
        %v1000 = vlaneseq
        %v1001 = vshrl.u32 %v1000, 7
        %v1002 = vsub.s32 6, %v1001
        %v1003 = vrot.slane %v748, %v1002
        %1004 = vset.pattern.permute.xlu0 6
        %1005 = vperm.xlu0 %1004, %v766
        %v1006 = vpop.permute.xlu0 %1005
        %1008 = vset.pattern.permute.xlu0 6
        %1009 = vperm.xlu0 %1008, %v767
        %v1010 = vpop.permute.xlu0 %1009
        %v1012 = vmul.f32 %v1003, %v1006
        %v1013 = vmul.f32 %v1003, %v1010
        %1014 = vst [vmem:[#allocation8 + $0x60] sm:$0xff] %v1012
        %1015 = vst [vmem:[#allocation8 + $0x68] sm:$0xff] %v1013
        %v1016 = vlaneseq
        %v1017 = vshrl.u32 %v1016, 7
        %v1018 = vsub.s32 7, %v1017
        %v1019 = vrot.slane %v747, %v1018
        %v1020 = vmul.f32 %v1019, %v745
        %v1021 = vmul.f32 %v1019, %v746
        %v1022 = vmul.f32 %v1020, 1.442695
        %v1023 = vpow.pop %v1022
        %v1024 = vmul.f32 %v1021, 1.442695
        %v1025 = vpow.pop %v1024
        %1026 = vst [vmem:[#allocation7 + $0x70] sm:$0xff] %v1023
        %1027 = vst [vmem:[#allocation7 + $0x78] sm:$0xff] %v1025
        %v1028 = vlaneseq
        %v1029 = vshrl.u32 %v1028, 7
        %v1030 = vsub.s32 7, %v1029
        %v1031 = vrot.slane %v748, %v1030
        %1032 = vset.pattern.permute.xlu0 7
        %1033 = vperm.xlu0 %1032, %v766
        %v1034 = vpop.permute.xlu0 %1033
        %1036 = vset.pattern.permute.xlu0 7
        %1037 = vperm.xlu0 %1036, %v767
        %v1038 = vpop.permute.xlu0 %1037
        %v1040 = vmul.f32 %v1031, %v1034
        %v1041 = vmul.f32 %v1031, %v1038
        %1042 = vst [vmem:[#allocation8 + $0x70] sm:$0xff] %v1040
        %1043 = vst [vmem:[#allocation8 + $0x78] sm:$0xff] %v1041
        %v1044 = vld [vmem:[#allocation7] sm:$0xff]
        %v1045 = vld [vmem:[#allocation7 + $0x8] sm:$0xff]
        %v1046 = vmul.f32 %v1044, 0.0
        %v1047 = vmul.f32 %v1045, 0.0
        %v1048 = vld [vmem:[#allocation8] sm:$0xff]
        %v1049 = vld [vmem:[#allocation8 + $0x8] sm:$0xff]
        %v1050 = vadd.f32 %v1046, %v1048
        %v1051 = vadd.f32 %v1047, %v1049
        %1053 = vset.pattern.permute.xlu0 0
        %1054 = vperm.xlu0 %1053, %v802
        %v1055 = vpop.permute.xlu0 %1054
        %1058 = vset.pattern.permute.xlu0 0
        %1059 = vperm.xlu0 %1058, %v803
        %v1060 = vpop.permute.xlu0 %1059
        %v1062 = vmul.f32 %v1050, %v1055
        %v1063 = vmul.f32 %v1051, %v1060
        %v1064 = vadd.f32 %v1062, %v1063
        %v1065 = vrot.slane %v1064, 4
        %v1066 = vadd.f32 %v1064, %v1065
        %v1067 = vrot.slane %v1066, 2
        %v1068 = vadd.f32 %v1066, %v1067
        %v1069 = vrot.slane %v1068, 1
        %v1070 = vadd.f32 %v1068, %v1069
        %v1071 = vld [vmem:[#allocation7 + $0x10] sm:$0xff]
        %v1072 = vld [vmem:[#allocation7 + $0x18] sm:$0xff]
        %v1073 = vmul.f32 %v1071, %v1050
        %v1074 = vmul.f32 %v1072, %v1051
        %v1075 = vld [vmem:[#allocation8 + $0x10] sm:$0xff]
        %v1076 = vld [vmem:[#allocation8 + $0x18] sm:$0xff]
        %v1077 = vadd.f32 %v1073, %v1075
        %v1078 = vadd.f32 %v1074, %v1076
        %1079 = vset.pattern.permute.xlu0 1
        %1080 = vperm.xlu0 %1079, %v802
        %v1081 = vpop.permute.xlu0 %1080
        %1083 = vset.pattern.permute.xlu0 1
        %1084 = vperm.xlu0 %1083, %v803
        %v1085 = vpop.permute.xlu0 %1084
        %v1087 = vmul.f32 %v1077, %v1081
        %v1088 = vmul.f32 %v1078, %v1085
        %v1089 = vadd.f32 %v1087, %v1088
        %v1090 = vrot.slane %v1089, 4
        %v1091 = vadd.f32 %v1089, %v1090
        %v1092 = vrot.slane %v1091, 2
        %v1093 = vadd.f32 %v1091, %v1092
        %v1094 = vrot.slane %v1093, 1
        %v1095 = vadd.f32 %v1093, %v1094
        %v1096 = vld [vmem:[#allocation7 + $0x20] sm:$0xff]
        %v1097 = vld [vmem:[#allocation7 + $0x28] sm:$0xff]
        %v1098 = vmul.f32 %v1096, %v1077
        %v1099 = vmul.f32 %v1097, %v1078
        %v1100 = vld [vmem:[#allocation8 + $0x20] sm:$0xff]
        %v1101 = vld [vmem:[#allocation8 + $0x28] sm:$0xff]
        %v1102 = vadd.f32 %v1098, %v1100
        %v1103 = vadd.f32 %v1099, %v1101
        %1104 = vset.pattern.permute.xlu0 2
        %1105 = vperm.xlu0 %1104, %v802
        %v1106 = vpop.permute.xlu0 %1105
        %1108 = vset.pattern.permute.xlu0 2
        %1109 = vperm.xlu0 %1108, %v803
        %v1110 = vpop.permute.xlu0 %1109
        %v1112 = vmul.f32 %v1102, %v1106
        %v1113 = vmul.f32 %v1103, %v1110
        %v1114 = vadd.f32 %v1112, %v1113
        %v1115 = vrot.slane %v1114, 4
        %v1116 = vadd.f32 %v1114, %v1115
        %v1117 = vrot.slane %v1116, 2
        %v1118 = vadd.f32 %v1116, %v1117
        %v1119 = vrot.slane %v1118, 1
        %v1120 = vadd.f32 %v1118, %v1119
        %v1121 = vld [vmem:[#allocation7 + $0x30] sm:$0xff]
        %v1122 = vld [vmem:[#allocation7 + $0x38] sm:$0xff]
        %v1123 = vmul.f32 %v1121, %v1102
        %v1124 = vmul.f32 %v1122, %v1103
        %v1125 = vld [vmem:[#allocation8 + $0x30] sm:$0xff]
        %v1126 = vld [vmem:[#allocation8 + $0x38] sm:$0xff]
        %v1127 = vadd.f32 %v1123, %v1125
        %v1128 = vadd.f32 %v1124, %v1126
        %1129 = vset.pattern.permute.xlu0 3
        %1130 = vperm.xlu0 %1129, %v802
        %v1131 = vpop.permute.xlu0 %1130
        %1133 = vset.pattern.permute.xlu0 3
        %1134 = vperm.xlu0 %1133, %v803
        %v1135 = vpop.permute.xlu0 %1134
        %v1137 = vmul.f32 %v1127, %v1131
        %v1138 = vmul.f32 %v1128, %v1135
        %v1139 = vadd.f32 %v1137, %v1138
        %v1140 = vrot.slane %v1139, 4
        %v1141 = vadd.f32 %v1139, %v1140
        %v1142 = vrot.slane %v1141, 2
        %v1143 = vadd.f32 %v1141, %v1142
        %v1144 = vrot.slane %v1143, 1
        %v1145 = vadd.f32 %v1143, %v1144
        %v1146 = vld [vmem:[#allocation7 + $0x40] sm:$0xff]
        %v1147 = vld [vmem:[#allocation7 + $0x48] sm:$0xff]
        %v1148 = vmul.f32 %v1146, %v1127
        %v1149 = vmul.f32 %v1147, %v1128
        %v1150 = vld [vmem:[#allocation8 + $0x40] sm:$0xff]
        %v1151 = vld [vmem:[#allocation8 + $0x48] sm:$0xff]
        %v1152 = vadd.f32 %v1148, %v1150
        %v1153 = vadd.f32 %v1149, %v1151
        %1154 = vset.pattern.permute.xlu0 4
        %1155 = vperm.xlu0 %1154, %v802
        %v1156 = vpop.permute.xlu0 %1155
        %1158 = vset.pattern.permute.xlu0 4
        %1159 = vperm.xlu0 %1158, %v803
        %v1160 = vpop.permute.xlu0 %1159
        %v1162 = vmul.f32 %v1152, %v1156
        %v1163 = vmul.f32 %v1153, %v1160
        %v1164 = vadd.f32 %v1162, %v1163
        %v1165 = vrot.slane %v1164, 4
        %v1166 = vadd.f32 %v1164, %v1165
        %v1167 = vrot.slane %v1166, 2
        %v1168 = vadd.f32 %v1166, %v1167
        %v1169 = vrot.slane %v1168, 1
        %v1170 = vadd.f32 %v1168, %v1169
        %v1171 = vld [vmem:[#allocation7 + $0x50] sm:$0xff]
        %v1172 = vld [vmem:[#allocation7 + $0x58] sm:$0xff]
        %v1173 = vmul.f32 %v1171, %v1152
        %v1174 = vmul.f32 %v1172, %v1153
        %v1175 = vld [vmem:[#allocation8 + $0x50] sm:$0xff]
        %v1176 = vld [vmem:[#allocation8 + $0x58] sm:$0xff]
        %v1177 = vadd.f32 %v1173, %v1175
        %v1178 = vadd.f32 %v1174, %v1176
        %1179 = vset.pattern.permute.xlu0 5
        %1180 = vperm.xlu0 %1179, %v802
        %v1181 = vpop.permute.xlu0 %1180
        %1183 = vset.pattern.permute.xlu0 5
        %1184 = vperm.xlu0 %1183, %v803
        %v1185 = vpop.permute.xlu0 %1184
        %v1187 = vmul.f32 %v1177, %v1181
        %v1188 = vmul.f32 %v1178, %v1185
        %v1189 = vadd.f32 %v1187, %v1188
        %v1190 = vrot.slane %v1189, 4
        %v1191 = vadd.f32 %v1189, %v1190
        %v1192 = vrot.slane %v1191, 2
        %v1193 = vadd.f32 %v1191, %v1192
        %v1194 = vrot.slane %v1193, 1
        %v1195 = vadd.f32 %v1193, %v1194
        %v1196 = vld [vmem:[#allocation7 + $0x60] sm:$0xff]
        %v1197 = vld [vmem:[#allocation7 + $0x68] sm:$0xff]
        %v1198 = vmul.f32 %v1196, %v1177
        %v1199 = vmul.f32 %v1197, %v1178
        %v1200 = vld [vmem:[#allocation8 + $0x60] sm:$0xff]
        %v1201 = vld [vmem:[#allocation8 + $0x68] sm:$0xff]
        %v1202 = vadd.f32 %v1198, %v1200
        %v1203 = vadd.f32 %v1199, %v1201
        %1204 = vset.pattern.permute.xlu0 6
        %1205 = vperm.xlu0 %1204, %v802
        %v1206 = vpop.permute.xlu0 %1205
        %1208 = vset.pattern.permute.xlu0 6
        %1209 = vperm.xlu0 %1208, %v803
        %v1210 = vpop.permute.xlu0 %1209
        %v1212 = vmul.f32 %v1202, %v1206
        %v1213 = vmul.f32 %v1203, %v1210
        %v1214 = vadd.f32 %v1212, %v1213
        %v1215 = vrot.slane %v1214, 4
        %v1216 = vadd.f32 %v1214, %v1215
        %v1217 = vrot.slane %v1216, 2
        %v1218 = vadd.f32 %v1216, %v1217
        %v1219 = vrot.slane %v1218, 1
        %v1220 = vadd.f32 %v1218, %v1219
        %v1221 = vld [vmem:[#allocation7 + $0x70] sm:$0xff]
        %v1222 = vld [vmem:[#allocation7 + $0x78] sm:$0xff]
        %v1223 = vmul.f32 %v1221, %v1202
        %v1224 = vmul.f32 %v1222, %v1203
        %v1225 = vld [vmem:[#allocation8 + $0x70] sm:$0xff]
        %v1226 = vld [vmem:[#allocation8 + $0x78] sm:$0xff]
        %v1227 = vadd.f32 %v1223, %v1225
        %v1228 = vadd.f32 %v1224, %v1226
        %1229 = vset.pattern.permute.xlu0 7
        %1230 = vperm.xlu0 %1229, %v802
        %v1231 = vpop.permute.xlu0 %1230
        %1233 = vset.pattern.permute.xlu0 7
        %1234 = vperm.xlu0 %1233, %v803
        %v1235 = vpop.permute.xlu0 %1234
        %v1237 = vmul.f32 %v1227, %v1231
        %v1238 = vmul.f32 %v1228, %v1235
        %v1239 = vadd.f32 %v1237, %v1238
        %v1240 = vrot.slane %v1239, 4
        %v1241 = vadd.f32 %v1239, %v1240
        %v1242 = vrot.slane %v1241, 2
        %v1243 = vadd.f32 %v1241, %v1242
        %v1244 = vrot.slane %v1243, 1
        %v1245 = vadd.f32 %v1243, %v1244
        %v1246 = vld [vmem:[#allocation6] sm:$0xff]
        %vm1247 = vcmask 1040384
        %v1248 = vsel %vm1247, %v1070, %v1095
        %vm1249 = vcmask 1041408
        %v1250 = vsel %vm1249, %v1248, %v1120
        %vm1251 = vcmask 1042432
        %v1252 = vsel %vm1251, %v1250, %v1145
        %vm1253 = vcmask 1043456
        %v1254 = vsel %vm1253, %v1252, %v1170
        %vm1255 = vcmask 1044480
        %v1256 = vsel %vm1255, %v1254, %v1195
        %vm1257 = vcmask 1045504
        %v1258 = vsel %vm1257, %v1256, %v1220
        %vm1259 = vcmask 1046528
        %v1260 = vsel %vm1259, %v1258, %v1245
        %v1261 = vadd.f32 %v1246, %v1260
        %1262 = vst [vmem:[#allocation6] sm:$0xff] %v1261
        %v1263 = vld [vmem:[#allocation2] sm:$0xff]
        %v1264 = vld [vmem:[#allocation6] sm:$0xff]
        %v1265 = vxor.u32 %v1263, 2147483648
        %v1266 = vmul.f32 %v1265, 1.442695
        %v1267 = vpow.pop %v1266
        %v1268 = vadd.f32 %v1267, 1.0
        %v1269 = vrcp.pop %v1268
        %v1270 = vmul.f32 1.0, %v1269
        %v1271 = vmul.f32 %v1263, %v1270
        %v1272 = vmul.f32 %v1264, %v1271
        %v1273 = vld [vmem:[#allocation17] sm:$0xff]
        %v1274 = vld [vmem:[#allocation17 + $0x8] sm:$0xff]
        %v1275 = vld [vmem:[#allocation17 + $0x10] sm:$0xff]
        %v1276 = vld [vmem:[#allocation17 + $0x18] sm:$0xff]
        %v1277 = vld [vmem:[#allocation17 + $0x20] sm:$0xff]
        %v1278 = vld [vmem:[#allocation17 + $0x28] sm:$0xff]
        %v1279 = vld [vmem:[#allocation17 + $0x30] sm:$0xff]
        %v1280 = vld [vmem:[#allocation17 + $0x38] sm:$0xff]
        %v1281 = vld [vmem:[#allocation17 + $0x40] sm:$0xff]
        %v1282 = vld [vmem:[#allocation17 + $0x48] sm:$0xff]
        %v1283 = vld [vmem:[#allocation17 + $0x50] sm:$0xff]
        %v1284 = vld [vmem:[#allocation17 + $0x58] sm:$0xff]
        %v1285 = vld [vmem:[#allocation17 + $0x60] sm:$0xff]
        %v1286 = vld [vmem:[#allocation17 + $0x68] sm:$0xff]
        %v1287 = vld [vmem:[#allocation17 + $0x70] sm:$0xff]
        %v1288 = vld [vmem:[#allocation17 + $0x78] sm:$0xff]
        %1289 = vmatprep.subr.mxu0 0.0
        %1290 = vmatpush1.msra.mxu0 %v1273
        %1291 = vmatprep.subr.mxu0 0.0
        %1292 = vmatpush1.msra.mxu0 %v1274
        %1293 = vmatprep.subr.mxu0 0.0
        %1294 = vmatpush1.msra.mxu0 %v1275
        %1295 = vmatprep.subr.mxu0 0.0
        %1296 = vmatpush1.msra.mxu0 %v1276
        %1297 = vmatprep.subr.mxu0 0.0
        %1298 = vmatpush1.msra.mxu0 %v1277
        %1299 = vmatprep.subr.mxu0 0.0
        %1300 = vmatpush1.msra.mxu0 %v1278
        %1301 = vmatprep.subr.mxu0 0.0
        %1302 = vmatpush1.msra.mxu0 %v1279
        %1303 = vmatprep.subr.mxu0 0.0
        %1304 = vmatpush1.msra.mxu0 %v1280
        %1305 = vmatprep.subr.mxu0 0.0
        %1306 = vmatpush1.msra.mxu0 %v1281
        %1307 = vmatprep.subr.mxu0 0.0
        %1308 = vmatpush1.msra.mxu0 %v1282
        %1309 = vmatprep.subr.mxu0 0.0
        %1310 = vmatpush1.msra.mxu0 %v1283
        %1311 = vmatprep.subr.mxu0 0.0
        %1312 = vmatpush1.msra.mxu0 %v1284
        %1313 = vmatprep.subr.mxu0 0.0
        %1314 = vmatpush1.msra.mxu0 %v1285
        %1315 = vmatprep.subr.mxu0 0.0
        %1316 = vmatpush1.msra.mxu0 %v1286
        %1317 = vmatprep.subr.mxu0 0.0
        %1318 = vmatpush1.msra.mxu0 %v1287
        %1319 = vmatprep.subr.mxu0 0.0
        %1320 = vmatpush1.msra.mxu0 %v1288
        %1321 = vmatprep.subr.mxu0 0.0
        %1322 = vmatpush1.msra.mxu0 0.0
        %1323 = vmatprep.subr.mxu0 0.0
        %1324 = vmatpush1.msra.mxu0 0.0
        %1325 = vmatprep.subr.mxu0 0.0
        %1326 = vmatpush1.msra.mxu0 0.0
        %1327 = vmatprep.subr.mxu0 0.0
        %1328 = vmatpush1.msra.mxu0 0.0
        %1329 = vmatprep.subr.mxu0 0.0
        %1330 = vmatpush1.msra.mxu0 0.0
        %1331 = vmatprep.subr.mxu0 0.0
        %1332 = vmatpush1.msra.mxu0 0.0
        %1333 = vmatprep.subr.mxu0 0.0
        %1334 = vmatpush1.msra.mxu0 0.0
        %1335 = vmatprep.subr.mxu0 0.0
        %1336 = vmatpush1.msra.mxu0 0.0
        %1337 = vmatprep.subr.mxu0 0.0
        %1338 = vmatpush1.msra.mxu0 0.0
        %1339 = vmatprep.subr.mxu0 0.0
        %1340 = vmatpush1.msra.mxu0 0.0
        %1341 = vmatprep.subr.mxu0 0.0
        %1342 = vmatpush1.msra.mxu0 0.0
        %1343 = vmatprep.subr.mxu0 0.0
        %1344 = vmatpush1.msra.mxu0 0.0
        %1345 = vmatprep.subr.mxu0 0.0
        %1346 = vmatpush1.msra.mxu0 0.0
        %1347 = vmatprep.subr.mxu0 0.0
        %1348 = vmatpush1.msra.mxu0 0.0
        %1349 = vmatprep.subr.mxu0 0.0
        %1350 = vmatpush1.msra.mxu0 0.0
        %1351 = vmatprep.subr.mxu0 0.0
        %1352 = vmatpush1.msra.mxu0 0.0
        %1353 = vmatprep.mubr.f32.mxu0 0.0
        %1354 = vmatmul.mubr.f32.gmra.mrb[0].mxu0 %v1272
        %v1355 = vpop.f32.mrb[0].mxu0
        %v1356 = vadd.f32 0.0, %v1355
        %v1357 = vpop.f32.mrb[0].mxu0
        %1358 = vdwg.mxu0
        %v1359 = vld [vmem:[%s380] sm:$0xff]
        %v1360 = vadd.f32 %v1359, %v1356
        %1361 = vst.msk [vmem:[%s432] sm:$0xff] %vm435, %v1360
        %s1362 = sand.u32 %s252, 1
        %s1363 = scalar_lea.sflag [#allocation11], %s1362
        %s1364 = sand.u32 %s252, 1
        %s1365 = smul.addr %s1364, 8
        %s1366 = scalar_lea.vmem [#allocation18], %s1365
        // Predicated region
        $region81: #{_lambda_.1} parent=59 // pred_check
          %p1367 = pneg %p262
        $region82: #{_lambda_.1} parent=59 // pred_check_branch
          %1369 = sbr.rel (%p1367) target = $region84
        $region83: #{_lambda_.1} parent=59 // pred_region
          %s1371 = ssub.s32 128, 128
          %1372 = vsyncadd %s1363, %s1371
          %s1373 = smul.addr %s29, 128
          %s1374 = scalar_lea.hbm %s10, %s1373
          %s1376 = sshll.u32 %s1366, 4
          %s1377 = int_to_ptr.vmem [resolvable:$true] %s1376
          %1379 = dma.vmem_to_hbm [thread:$0]  %s1377, 128, %s1374, %s1363
        $region84: #{_lambda_.1} parent=59 // pred_fallthru
          _
      $region60: #{_lambda_.1} parent=5 // pred_fallthru
        _
      %p1380 = scmp.le.s32.totalorder 2, %s24
      // Predicated region
      $region85: #{_lambda_.1} parent=5 // pred_check
        %p1381 = pneg %p1380
      $region86: #{_lambda_.1} parent=5 // pred_check_branch
        %1383 = sbr.rel (%p1381) target = $region88
      $region87: #{_lambda_.1} parent=5 // pred_region
        %s1384 = ssub.s32 %s24, 2
        // Predicated region
        $region89: #{_lambda_.1} parent=87 // pred_check
          %p1385 = pneg %p268
        $region90: #{_lambda_.1} parent=87 // pred_check_branch
          %1387 = sbr.rel (%p1385) target = $region92
        $region91: #{_lambda_.1} parent=87 // pred_region
          %s1388 = sand.u32 %s253, 1
          %s1389 = scalar_lea.sflag [#allocation11], %s1388
          %s1390 = sand.u32 %s253, 1
          %s1391 = smul.addr %s1390, 8
          %s1392 = scalar_lea.vmem [#allocation18], %s1391
          %1393 = dma.done %s1389, 128
        $region92: #{_lambda_.1} parent=87 // pred_fallthru
          _
      $region88: #{_lambda_.1} parent=5 // pred_fallthru
        _
    $region6: #{_lambda_.1} parent=1 // loop_footer
      %s28 = sadd.s32 1, %s24
    $region7: #{_lambda_.1} parent=1 // loop_footer_branch
      %23 = sbr.rel target = $region3
    $region8: #{_lambda_.1} parent=1 // loop_exit
      _
    %1394 = vsyncpa [#allocation10], 1
    %s1395 = scalar_lea.sflag [#allocation10], 1
    %1396 = vsyncpa %s1395, 1
    %1397 = vsyncpa [#allocation13], 1
    %1398 = vsyncpa [#allocation16], 1
    %1399 = vsyncpa [#allocation11], 1
    %s1400 = scalar_lea.sflag [#allocation11], 1
    %1401 = vsyncpa %s1400, 1

</llo_original>
